<compile_context>
chip_gen: v7x
topology: tpu7x:2x2x1
jax: 0.10.0
libtpu: 0.0.40
codegen_flags: <defaults>
</compile_context>

<pallas_src>
import jax
import jax.numpy as jnp
from jax.experimental import pallas as pl
from jax.experimental.pallas import tpu as pltpu

# ----- small CLIP-like config (real ViT-L/14 text: D=768, H=12, L=12, S=77) --
B = 2          # batch
S = 8          # max_length (sequence length; pad to mult. of 8 at real scale)
D = 32         # hidden size
H = 4          # attention heads
DH = D // H    # head dim
F = 4 * D      # MLP intermediate size
L = 2          # number of encoder layers
V = 99         # vocab size
M = B * S      # fused batch*seq rows
EPS = 1e-5
MASK_VAL = -1e9   # finite additive mask (avoids -inf overflow of finfo.min)


def _layernorm(x, w, b):
    mu = jnp.mean(x, axis=-1, keepdims=True)
    var = jnp.mean((x - mu) ** 2, axis=-1, keepdims=True)
    return (x - mu) * jax.lax.rsqrt(var + EPS) * w + b


# --------------------------- fused encoder kernel ----------------------------
def clip_text_kernel(x_ref, mask_ref, vecs_ref, wqkv_ref, wo_ref, w1_ref,
                     b1_ref, w2_ref, o_ref, h_ref, ctx_ref):
    l = pl.program_id(0)

    # Residual-stream carry: initialised from embeddings at layer 0, then kept
    # resident in VMEM across all L grid steps (no HBM activation round trips).
    @pl.when(l == 0)
    def _():
        h_ref[...] = x_ref[...]

    x = h_ref[...]                                   # (M, D) f32
    vecs = vecs_ref[0]                               # (16, D) f32 packed vectors
    ln1w, ln1b = vecs[0:1], vecs[1:2]
    ln2w, ln2b = vecs[2:3], vecs[3:4]
    bq, bk, bv = vecs[4:5], vecs[5:6], vecs[6:7]     # bq already scaled
    bo, b2 = vecs[7:8], vecs[8:9]

    # ---------------- self-attention block (pre-LN) ----------------
    h1 = _layernorm(x, ln1w, ln1b).astype(jnp.bfloat16)          # (M, D)

    # fused, lane-dense QKV projection: one (M,D)x(D,3D) MXU matmul
    qkv = jnp.dot(h1, wqkv_ref[0], preferred_element_type=jnp.float32)  # (M,3D)
    q = (qkv[:, 0:D] + bq).astype(jnp.bfloat16)      # 1/sqrt(DH) folded in
    k = (qkv[:, D:2 * D] + bk).astype(jnp.bfloat16)
    v = (qkv[:, 2 * D:3 * D] + bv).astype(jnp.bfloat16)

    # head split via static lane slices + leading-axis stack -> (H, M, DH)
    qh = jnp.stack([q[:, h * DH:(h + 1) * DH] for h in range(H)], axis=0)
    kh = jnp.stack([k[:, h * DH:(h + 1) * DH] for h in range(H)], axis=0)
    vh = jnp.stack([v[:, h * DH:(h + 1) * DH] for h in range(H)], axis=0)

    # head-batched attention over the full M axis; the block-diagonal causal
    # mask (precomputed in the wrapper) kills cross-batch entries, so no
    # per-batch loop / slicing is needed.
    s = jnp.einsum('hqe,hke->hqk', qh, kh,
                   preferred_element_type=jnp.float32) + mask_ref[...]
    s = s - jnp.max(s, axis=-1, keepdims=True)
    p = jnp.exp(s)
    p = p * pl.reciprocal(jnp.sum(p, axis=-1, keepdims=True), approx=True)
    ctx = jnp.einsum('hqk,hke->hqe', p.astype(jnp.bfloat16), vh,
                     preferred_element_type=jnp.float32)          # (H, M, DH)

    # assemble per-head context into one (M, H*DH) bf16 block (no concatenate)
    for h in range(H):
        ctx_ref[:, h * DH:(h + 1) * DH] = ctx[h].astype(jnp.bfloat16)

    # single full-width output projection (M,D)x(D,D)
    attn = jnp.dot(ctx_ref[...], wo_ref[0],
                   preferred_element_type=jnp.float32) + bo
    x = x + attn

    # ---------------- MLP block (pre-LN) ----------------
    h2 = _layernorm(x, ln2w, ln2b).astype(jnp.bfloat16)
    m = jnp.dot(h2, w1_ref[0], preferred_element_type=jnp.float32) + b1_ref[0]
    # quick_gelu kept in f32 (matches reference; bf16 variant is a v6e-only
    # micro-opt since v5e has no bf16 VPU/EUP path).
    m = m * jax.nn.sigmoid(1.702 * m)
    m = jnp.dot(m.astype(jnp.bfloat16), w2_ref[0],
                preferred_element_type=jnp.float32) + b2
    x = x + m

    h_ref[...] = x                                   # carry to next layer

    # final LayerNorm folded into the last grid step
    @pl.when(l == pl.num_programs(0) - 1)
    def _():
        o_ref[...] = _layernorm(x, vecs[9:10], vecs[10:11]).astype(o_ref.dtype)


# --------------------------- wrappers ----------------------------------------
def _layer_spec(arr):
    """Block = full array minus the leading (layer) axis, indexed by grid step."""
    n = arr.ndim
    return pl.BlockSpec((1,) + tuple(arr.shape[1:]),
                        lambda l, _n=n: (l,) + (0,) * (_n - 1))


def _const_spec(shape):
    n = len(shape)
    return pl.BlockSpec(tuple(shape), lambda l, _n=n: (0,) * _n)


def pack_params(params):
    """Stack per-layer params with a leading L axis; big weights -> bf16."""
    def stack(fn):
        return jnp.stack([fn(p) for p in params["layers"]], axis=0)

    scale = 1.0 / (DH ** 0.5)

    # fused lane-dense QKV weight: (L, D, 3D); 1/sqrt(DH) folded into wq
    wqkv = stack(lambda p: jnp.concatenate(
        [p["wq"] * scale, p["wk"], p["wv"]], axis=1)).astype(jnp.bfloat16)
    wo = stack(lambda p: p["wo"]).astype(jnp.bfloat16)          # (L, D, D)
    w1 = stack(lambda p: p["w1"]).astype(jnp.bfloat16)          # (L, D, F)
    b1 = stack(lambda p: p["b1"].reshape(1, F))                 # (L, 1, F)
    w2 = stack(lambda p: p["w2"]).astype(jnp.bfloat16)          # (L, F, D)

    # all small per-layer vectors packed into one (16, D) block; the final LN
    # (identical per layer, only read at the last step) is folded in too.
    zero = jnp.zeros((D,), jnp.float32)
    vecs = stack(lambda p: jnp.stack(
        [p["ln1_w"], p["ln1_b"], p["ln2_w"], p["ln2_b"],
         p["bq"] * scale, p["bk"], p["bv"], p["bo"], p["b2"],
         params["final_ln_w"], params["final_ln_b"],
         zero, zero, zero, zero, zero], axis=0))                # (L, 16, D)

    # block-diagonal causal mask over M = B*S: causal within each batch block,
    # fully masked across batches (-> cross-batch softmax weights are exactly 0)
    idx = jnp.arange(M)
    same_batch = (idx[:, None] // S) == (idx[None, :] // S)
    causal = idx[None, :] <= idx[:, None]
    mask = jnp.where(same_batch & causal, 0.0, MASK_VAL).astype(jnp.float32)

    return dict(mask=mask, vecs=vecs, wqkv=wqkv, wo=wo, w1=w1, b1=b1, w2=w2)


def clip_text_encoder(x_flat, packed):
    """x_flat: [B*S, D] f32 embeddings -> [B*S, D] f32 last_hidden_state."""
    in_specs = [
        _const_spec((M, D)),            # x (embeddings)
        _const_spec((M, M)),            # block-diagonal causal mask (hoisted)
        _layer_spec(packed["vecs"]),    # packed LN weights / biases / final LN
        _layer_spec(packed["wqkv"]),    # fused QKV weight (lane-dense)
        _layer_spec(packed["wo"]),
        _layer_spec(packed["w1"]),
        _layer_spec(packed["b1"]),
        _layer_spec(packed["w2"]),
    ]
    return pl.pallas_call(
        clip_text_kernel,
        out_shape=jax.ShapeDtypeStruct((M, D), jnp.float32),
        grid_spec=pltpu.PrefetchScalarGridSpec(
            num_scalar_prefetch=0,
            grid=(L,),
            in_specs=in_specs,
            out_specs=pl.BlockSpec((M, D), lambda l: (0, 0)),
            scratch_shapes=[
                pltpu.VMEM((M, D), jnp.float32),     # residual-stream carry
                pltpu.VMEM((M, D), jnp.bfloat16),    # assembled attn context
            ],
        ),
        compiler_params=pltpu.CompilerParams(
            dimension_semantics=("arbitrary",),      # layer axis is sequential
            # Explicit VMEM budget: above v5e's 16 MiB default scoped limit
            # (needed for double-buffered weights at real CLIP scale), below
            # v7x's 64 MiB physical VMEM.  Raise toward 96 MiB on v6e if
            # deeper (Buffered(3)) w1/w2 pipelining is enabled.
            vmem_limit_bytes=48 * 1024 * 1024,
        ),
    )(x_flat, packed["mask"], packed["vecs"], packed["wqkv"], packed["wo"],
      packed["w1"], packed["b1"], packed["w2"])


def frozen_clip_embedder_forward(token_ids, params, packed=None):
    """CLIP text model forward: returns last_hidden_state [B, S, D]."""
    if packed is None:
        packed = pack_params(params)
    # embeddings (glue): token gather + position add
    x = jnp.take(params["token_emb"], token_ids, axis=0)        # [B, S, D]
    x = x + params["pos_emb"][None, :S, :]
    x_flat = x.reshape(M, D).astype(jnp.float32)                # collapse B,S -> M
    out = clip_text_encoder(x_flat, packed)                     # fused Pallas path
    return out.reshape(B, S, D)


# --------------------------- reference (pure JAX) -----------------------------
def _ref_forward(token_ids, params):
    bf = lambda a: a.astype(jnp.bfloat16)
    x = jnp.take(params["token_emb"], token_ids, axis=0) + params["pos_emb"][None, :S, :]
    row = jnp.arange(S)[:, None]
    col = jnp.arange(S)[None, :]
    mask = jnp.where(col > row, MASK_VAL, 0.0).astype(jnp.float32)
    scale = 1.0 / (DH ** 0.5)
    for p in params["layers"]:
        h = _layernorm(x, p["ln1_w"], p["ln1_b"])
        q = jnp.einsum('bsd,de->bse', bf(h), bf(p["wq"]),
                       preferred_element_type=jnp.float32) + p["bq"]
        k = jnp.einsum('bsd,de->bse', bf(h), bf(p["wk"]),
                       preferred_element_type=jnp.float32) + p["bk"]
        v = jnp.einsum('bsd,de->bse', bf(h), bf(p["wv"]),
                       preferred_element_type=jnp.float32) + p["bv"]
        q = q * scale
        qh = q.reshape(B, S, H, DH).transpose(0, 2, 1, 3)
        kh = k.reshape(B, S, H, DH).transpose(0, 2, 1, 3)
        vh = v.reshape(B, S, H, DH).transpose(0, 2, 1, 3)
        s = jnp.einsum('bhqe,bhke->bhqk', bf(qh), bf(kh),
                       preferred_element_type=jnp.float32) + mask
        s = s - jnp.max(s, axis=-1, keepdims=True)
        pr = jnp.exp(s)
        pr = pr / jnp.sum(pr, axis=-1, keepdims=True)
        ctx = jnp.einsum('bhqk,bhke->bhqe', bf(pr), bf(vh),
                         preferred_element_type=jnp.float32)
        ctx = ctx.transpose(0, 2, 1, 3).reshape(B, S, D)
        attn = jnp.einsum('bsd,de->bse', bf(ctx), bf(p["wo"]),
                          preferred_element_type=jnp.float32) + p["bo"]
        x = x + attn
        h = _layernorm(x, p["ln2_w"], p["ln2_b"])
        m = jnp.einsum('bsd,df->bsf', bf(h), bf(p["w1"]),
                       preferred_element_type=jnp.float32) + p["b1"]
        m = m * jax.nn.sigmoid(1.702 * m)
        m = jnp.einsum('bsf,fd->bsd', bf(m), bf(p["w2"]),
                       preferred_element_type=jnp.float32) + p["b2"]
        x = x + m
    return _layernorm(x, params["final_ln_w"], params["final_ln_b"])


# --------------------------- param init & main --------------------------------
def make_params(key):
    def nrm(k, shape, scale=0.02):
        return (scale * jax.random.normal(k, shape)).astype(jnp.float32)

    keys = jax.random.split(key, 2 + L)
    params = {
        "token_emb": nrm(keys[0], (V, D)),
        "pos_emb": nrm(keys[1], (S, D)),
        "final_ln_w": jnp.ones((D,), jnp.float32),
        "final_ln_b": jnp.zeros((D,), jnp.float32),
        "layers": [],
    }
    for li in range(L):
        ks = jax.random.split(keys[2 + li], 16)
        params["layers"].append({
            "ln1_w": 1.0 + nrm(ks[0], (D,)), "ln1_b": nrm(ks[1], (D,)),
            "wq": nrm(ks[2], (D, D)), "bq": nrm(ks[3], (D,)),
            "wk": nrm(ks[4], (D, D)), "bk": nrm(ks[5], (D,)),
            "wv": nrm(ks[6], (D, D)), "bv": nrm(ks[7], (D,)),
            "wo": nrm(ks[8], (D, D)), "bo": nrm(ks[9], (D,)),
            "ln2_w": 1.0 + nrm(ks[10], (D,)), "ln2_b": nrm(ks[11], (D,)),
            "w1": nrm(ks[12], (D, F)), "b1": nrm(ks[13], (F,)),
            "w2": nrm(ks[14], (F, D)), "b2": nrm(ks[15], (D,)),
        })
    return params


if __name__ == "__main__":
    key = jax.random.PRNGKey(0)
    k_tok, k_par = jax.random.split(key)

    # TODO(synk): CLIPTokenizer (text -> token ids) is host-side string
    # processing with no Pallas equivalent; synthetic token ids stand in for
    # tokenizer(text, padding='max_length').
    token_ids = jax.random.randint(k_tok, (B, S), 0, V, dtype=jnp.int32)
    params = make_params(k_par)
    packed = pack_params(params)

    z = frozen_clip_embedder_forward(token_ids, params, packed)
    z = jax.block_until_ready(z)

    z_ref = jax.block_until_ready(_ref_forward(token_ids, params))
    assert z.shape == (B, S, D)
    assert jnp.all(jnp.isfinite(z)), "non-finite output"
    assert jnp.allclose(z, z_ref, rtol=1e-2, atol=1e-2), "mismatch vs reference"

    print("KERNEL_OK")
</pallas_src>

<mosaic_0001>
module attributes {stable_mosaic.version = 11 : i64} {
  func.func @clip_text_kernel(%arg0: i32, %arg1: memref<16x32xf32, #tpu.memory_space<vmem>>, %arg2: memref<16x16xf32, #tpu.memory_space<vmem>>, %arg3: memref<1x16x32xf32, #tpu.memory_space<vmem>>, %arg4: memref<1x32x96xbf16, #tpu.memory_space<vmem>>, %arg5: memref<1x32x32xbf16, #tpu.memory_space<vmem>>, %arg6: memref<1x32x128xbf16, #tpu.memory_space<vmem>>, %arg7: memref<1x1x128xf32, #tpu.memory_space<vmem>>, %arg8: memref<1x128x32xbf16, #tpu.memory_space<vmem>>, %arg9: memref<16x32xf32, #tpu.memory_space<vmem>>, %arg10: memref<16x32xf32, #tpu.memory_space<vmem>>, %arg11: memref<16x32xbf16, #tpu.memory_space<vmem>>) attributes {dimension_semantics = [#tpu.dimension_semantics<arbitrary>], iteration_bounds = array<i64: 2>, scalar_prefetch = 0 : i64, scratch_operands = 2 : i64, tpu.core_type = #tpu.core_type<tc>, window_params = [{pipeline_mode = #tpu.pipeline_mode<synchronous>, transform_indices = @transform_0, window_bounds = array<i64: 16, 32>}, {pipeline_mode = #tpu.pipeline_mode<synchronous>, transform_indices = @transform_1, window_bounds = array<i64: 16, 16>}, {transform_indices = @transform_2, window_bounds = array<i64: 1, 16, 32>}, {transform_indices = @transform_3, window_bounds = array<i64: 1, 32, 96>}, {transform_indices = @transform_4, window_bounds = array<i64: 1, 32, 32>}, {transform_indices = @transform_5, window_bounds = array<i64: 1, 32, 128>}, {transform_indices = @transform_6, window_bounds = array<i64: 1, 1, 128>}, {transform_indices = @transform_7, window_bounds = array<i64: 1, 128, 32>}, {pipeline_mode = #tpu.pipeline_mode<synchronous>, transform_indices = @transform_8, window_bounds = array<i64: 16, 32>}]} {
    %c0_i32 = arith.constant 0 : i32
    %0 = arith.cmpi eq, %arg0, %c0_i32 : i32
    %1 = arith.extui %0 : i1 to i32
    %c0_i32_0 = arith.constant 0 : i32
    %2 = arith.cmpi ne, %1, %c0_i32_0 : i32
    scf.if %2 {
      %c0_51 = arith.constant 0 : index
      %c0_52 = arith.constant 0 : index
      %169 = vector.load %arg1[%c0_51, %c0_52] : memref<16x32xf32, #tpu.memory_space<vmem>>, vector<16x32xf32>
      %c0_53 = arith.constant 0 : index
      %c0_54 = arith.constant 0 : index
      %170 = vector.load %arg10[%c0_53, %c0_54] : memref<16x32xf32, #tpu.memory_space<vmem>>, vector<16x32xf32>
      tpu.vector_store %arg10[%c0_53, %c0_54], %169 {strides = array<i32>} : memref<16x32xf32, #tpu.memory_space<vmem>>, vector<16x32xf32>,
    } else {
    }
    %c0 = arith.constant 0 : index
    %c0_1 = arith.constant 0 : index
    %3 = vector.load %arg10[%c0, %c0_1] : memref<16x32xf32, #tpu.memory_space<vmem>>, vector<16x32xf32>
    %c0_2 = arith.constant 0 : index
    %c0_3 = arith.constant 0 : index
    %c0_4 = arith.constant 0 : index
    %4 = vector.load %arg3[%c0_2, %c0_3, %c0_4] : memref<1x16x32xf32, #tpu.memory_space<vmem>>, vector<1x16x32xf32>
    %5 = vector.shape_cast %4 : vector<1x16x32xf32> to vector<16x32xf32>
    %6 = vector.extract_strided_slice %5 {offsets = [0, 0], sizes = [1, 32], strides = [1, 1]} : vector<16x32xf32> to vector<1x32xf32>
    %7 = vector.extract_strided_slice %5 {offsets = [1, 0], sizes = [1, 32], strides = [1, 1]} : vector<16x32xf32> to vector<1x32xf32>
    %8 = vector.extract_strided_slice %5 {offsets = [2, 0], sizes = [1, 32], strides = [1, 1]} : vector<16x32xf32> to vector<1x32xf32>
    %9 = vector.extract_strided_slice %5 {offsets = [3, 0], sizes = [1, 32], strides = [1, 1]} : vector<16x32xf32> to vector<1x32xf32>
    %10 = vector.extract_strided_slice %5 {offsets = [4, 0], sizes = [1, 32], strides = [1, 1]} : vector<16x32xf32> to vector<1x32xf32>
    %11 = vector.extract_strided_slice %5 {offsets = [5, 0], sizes = [1, 32], strides = [1, 1]} : vector<16x32xf32> to vector<1x32xf32>
    %12 = vector.extract_strided_slice %5 {offsets = [6, 0], sizes = [1, 32], strides = [1, 1]} : vector<16x32xf32> to vector<1x32xf32>
    %13 = vector.extract_strided_slice %5 {offsets = [7, 0], sizes = [1, 32], strides = [1, 1]} : vector<16x32xf32> to vector<1x32xf32>
    %14 = vector.extract_strided_slice %5 {offsets = [8, 0], sizes = [1, 32], strides = [1, 1]} : vector<16x32xf32> to vector<1x32xf32>
    %cst = arith.constant dense<0.000000e+00> : vector<16xf32>
    %15 = vector.multi_reduction <add>, %3, %cst [1] : vector<16x32xf32> to vector<16xf32>
    %16 = vector.shape_cast %15 : vector<16xf32> to vector<16x1xf32>
    %cst_5 = arith.constant 3.200000e+01 : f32
    %17 = vector.broadcast %cst_5 : f32 to vector<16x1xf32>
    %18 = arith.divf %16, %17 : vector<16x1xf32>
    %19 = vector.broadcast %18 : vector<16x1xf32> to vector<16x32xf32>
    %20 = arith.subf %3, %19 : vector<16x32xf32>
    %21 = arith.mulf %20, %20 : vector<16x32xf32>
    %cst_6 = arith.constant dense<0.000000e+00> : vector<16xf32>
    %22 = vector.multi_reduction <add>, %21, %cst_6 [1] : vector<16x32xf32> to vector<16xf32>
    %23 = vector.shape_cast %22 : vector<16xf32> to vector<16x1xf32>
    %cst_7 = arith.constant 3.200000e+01 : f32
    %24 = vector.broadcast %cst_7 : f32 to vector<16x1xf32>
    %25 = arith.divf %23, %24 : vector<16x1xf32>
    %26 = vector.broadcast %18 : vector<16x1xf32> to vector<16x32xf32>
    %27 = arith.subf %3, %26 : vector<16x32xf32>
    %cst_8 = arith.constant 9.99999974E-6 : f32
    %28 = vector.broadcast %cst_8 : f32 to vector<16x1xf32>
    %29 = arith.addf %25, %28 : vector<16x1xf32>
    %30 = math.rsqrt %29 : vector<16x1xf32>
    %31 = vector.broadcast %30 : vector<16x1xf32> to vector<16x32xf32>
    %32 = arith.mulf %27, %31 : vector<16x32xf32>
    %33 = vector.broadcast %6 : vector<1x32xf32> to vector<16x32xf32>
    %34 = arith.mulf %32, %33 : vector<16x32xf32>
    %35 = vector.broadcast %7 : vector<1x32xf32> to vector<16x32xf32>
    %36 = arith.addf %34, %35 : vector<16x32xf32>
    %37 = arith.truncf %36 : vector<16x32xf32> to vector<16x32xbf16>
    %c0_9 = arith.constant 0 : index
    %c0_10 = arith.constant 0 : index
    %c0_11 = arith.constant 0 : index
    %38 = vector.load %arg4[%c0_9, %c0_10, %c0_11] : memref<1x32x96xbf16, #tpu.memory_space<vmem>>, vector<1x32x96xbf16>
    %39 = vector.shape_cast %38 : vector<1x32x96xbf16> to vector<32x96xbf16>
    %cst_12 = arith.constant dense<0.000000e+00> : vector<16x96xf32>
    %40 = tpu.matmul %37, %39, %cst_12 {dimension_numbers = #tpu.dot_dimension_numbers<[1], [0], [0], [1], [0, 0, 1, 1], [], []>} : vector<16x32xbf16>, vector<32x96xbf16>, vector<16x96xf32> -> vector<16x96xf32>
    %41 = vector.extract_strided_slice %40 {offsets = [0, 0], sizes = [16, 32], strides = [1, 1]} : vector<16x96xf32> to vector<16x32xf32>
    %42 = vector.broadcast %10 : vector<1x32xf32> to vector<16x32xf32>
    %43 = arith.addf %41, %42 : vector<16x32xf32>
    %44 = arith.truncf %43 : vector<16x32xf32> to vector<16x32xbf16>
    %45 = vector.extract_strided_slice %40 {offsets = [0, 32], sizes = [16, 32], strides = [1, 1]} : vector<16x96xf32> to vector<16x32xf32>
    %46 = vector.broadcast %11 : vector<1x32xf32> to vector<16x32xf32>
    %47 = arith.addf %45, %46 : vector<16x32xf32>
    %48 = arith.truncf %47 : vector<16x32xf32> to vector<16x32xbf16>
    %49 = vector.extract_strided_slice %40 {offsets = [0, 64], sizes = [16, 32], strides = [1, 1]} : vector<16x96xf32> to vector<16x32xf32>
    %50 = vector.broadcast %12 : vector<1x32xf32> to vector<16x32xf32>
    %51 = arith.addf %49, %50 : vector<16x32xf32>
    %52 = arith.truncf %51 : vector<16x32xf32> to vector<16x32xbf16>
    %53 = vector.extract_strided_slice %44 {offsets = [0, 0], sizes = [16, 8], strides = [1, 1]} : vector<16x32xbf16> to vector<16x8xbf16>
    %54 = vector.extract_strided_slice %44 {offsets = [0, 8], sizes = [16, 8], strides = [1, 1]} : vector<16x32xbf16> to vector<16x8xbf16>
    %55 = vector.extract_strided_slice %44 {offsets = [0, 16], sizes = [16, 8], strides = [1, 1]} : vector<16x32xbf16> to vector<16x8xbf16>
    %56 = vector.extract_strided_slice %44 {offsets = [0, 24], sizes = [16, 8], strides = [1, 1]} : vector<16x32xbf16> to vector<16x8xbf16>
    %57 = vector.shape_cast %53 : vector<16x8xbf16> to vector<1x16x8xbf16>
    %58 = vector.shape_cast %54 : vector<16x8xbf16> to vector<1x16x8xbf16>
    %59 = vector.shape_cast %55 : vector<16x8xbf16> to vector<1x16x8xbf16>
    %60 = vector.shape_cast %56 : vector<16x8xbf16> to vector<1x16x8xbf16>
    %61 = tpu.concatenate %57, %58, %59, %60 in 0 : vector<1x16x8xbf16>, vector<1x16x8xbf16>, vector<1x16x8xbf16>, vector<1x16x8xbf16> -> vector<4x16x8xbf16>
    %62 = vector.extract_strided_slice %48 {offsets = [0, 0], sizes = [16, 8], strides = [1, 1]} : vector<16x32xbf16> to vector<16x8xbf16>
    %63 = vector.extract_strided_slice %48 {offsets = [0, 8], sizes = [16, 8], strides = [1, 1]} : vector<16x32xbf16> to vector<16x8xbf16>
    %64 = vector.extract_strided_slice %48 {offsets = [0, 16], sizes = [16, 8], strides = [1, 1]} : vector<16x32xbf16> to vector<16x8xbf16>
    %65 = vector.extract_strided_slice %48 {offsets = [0, 24], sizes = [16, 8], strides = [1, 1]} : vector<16x32xbf16> to vector<16x8xbf16>
    %66 = vector.shape_cast %62 : vector<16x8xbf16> to vector<1x16x8xbf16>
    %67 = vector.shape_cast %63 : vector<16x8xbf16> to vector<1x16x8xbf16>
    %68 = vector.shape_cast %64 : vector<16x8xbf16> to vector<1x16x8xbf16>
    %69 = vector.shape_cast %65 : vector<16x8xbf16> to vector<1x16x8xbf16>
    %70 = tpu.concatenate %66, %67, %68, %69 in 0 : vector<1x16x8xbf16>, vector<1x16x8xbf16>, vector<1x16x8xbf16>, vector<1x16x8xbf16> -> vector<4x16x8xbf16>
    %71 = vector.extract_strided_slice %52 {offsets = [0, 0], sizes = [16, 8], strides = [1, 1]} : vector<16x32xbf16> to vector<16x8xbf16>
    %72 = vector.extract_strided_slice %52 {offsets = [0, 8], sizes = [16, 8], strides = [1, 1]} : vector<16x32xbf16> to vector<16x8xbf16>
    %73 = vector.extract_strided_slice %52 {offsets = [0, 16], sizes = [16, 8], strides = [1, 1]} : vector<16x32xbf16> to vector<16x8xbf16>
    %74 = vector.extract_strided_slice %52 {offsets = [0, 24], sizes = [16, 8], strides = [1, 1]} : vector<16x32xbf16> to vector<16x8xbf16>
    %75 = vector.shape_cast %71 : vector<16x8xbf16> to vector<1x16x8xbf16>
    %76 = vector.shape_cast %72 : vector<16x8xbf16> to vector<1x16x8xbf16>
    %77 = vector.shape_cast %73 : vector<16x8xbf16> to vector<1x16x8xbf16>
    %78 = vector.shape_cast %74 : vector<16x8xbf16> to vector<1x16x8xbf16>
    %79 = tpu.concatenate %75, %76, %77, %78 in 0 : vector<1x16x8xbf16>, vector<1x16x8xbf16>, vector<1x16x8xbf16>, vector<1x16x8xbf16> -> vector<4x16x8xbf16>
    "tpu.trace_start"() <{level = 10 : i32, message = "hqe,hke->hqk"}> : () -> ()
    %cst_13 = arith.constant dense<0.000000e+00> : vector<4x16x16xf32>
    %80 = tpu.matmul %61, %70, %cst_13 {dimension_numbers = #tpu.dot_dimension_numbers<[2], [2], [1], [1], [0, 0, 0, 1, 1, 1], [0], [0]>} : vector<4x16x8xbf16>, vector<4x16x8xbf16>, vector<4x16x16xf32> -> vector<4x16x16xf32>
    "tpu.trace_stop"() : () -> ()
    %c0_14 = arith.constant 0 : index
    %c0_15 = arith.constant 0 : index
    %81 = vector.load %arg2[%c0_14, %c0_15] : memref<16x16xf32, #tpu.memory_space<vmem>>, vector<16x16xf32>
    %82 = vector.shape_cast %81 : vector<16x16xf32> to vector<1x16x16xf32>
    %83 = vector.broadcast %82 : vector<1x16x16xf32> to vector<4x16x16xf32>
    %84 = arith.addf %80, %83 : vector<4x16x16xf32>
    %cst_16 = arith.constant dense<0xFF800000> : vector<4x16xf32>
    %85 = vector.multi_reduction <maximumf>, %84, %cst_16 [2] : vector<4x16x16xf32> to vector<4x16xf32>
    %86 = vector.shape_cast %85 : vector<4x16xf32> to vector<4x16x1xf32>
    %87 = vector.broadcast %86 : vector<4x16x1xf32> to vector<4x16x16xf32>
    %88 = arith.subf %84, %87 : vector<4x16x16xf32>
    %89 = math.exp %88 : vector<4x16x16xf32>
    %cst_17 = arith.constant dense<0.000000e+00> : vector<4x16xf32>
    %90 = vector.multi_reduction <add>, %89, %cst_17 [2] : vector<4x16x16xf32> to vector<4x16xf32>
    %91 = vector.shape_cast %90 : vector<4x16xf32> to vector<4x16x1xf32>
    %92 = tpu.reciprocal %91 {approx = true} : vector<4x16x1xf32> -> vector<4x16x1xf32>
    %93 = vector.broadcast %92 : vector<4x16x1xf32> to vector<4x16x16xf32>
    %94 = arith.mulf %89, %93 : vector<4x16x16xf32>
    %95 = arith.truncf %94 : vector<4x16x16xf32> to vector<4x16x16xbf16>
    "tpu.trace_start"() <{level = 10 : i32, message = "hqk,hke->hqe"}> : () -> ()
    %cst_18 = arith.constant dense<0.000000e+00> : vector<4x16x8xf32>
    %96 = tpu.matmul %95, %79, %cst_18 {dimension_numbers = #tpu.dot_dimension_numbers<[2], [1], [1], [2], [0, 0, 0, 1, 1, 2], [0], [0]>} : vector<4x16x16xbf16>, vector<4x16x8xbf16>, vector<4x16x8xf32> -> vector<4x16x8xf32>
    "tpu.trace_stop"() : () -> ()
    %97 = vector.extract_strided_slice %96 {offsets = [0, 0, 0], sizes = [1, 16, 8], strides = [1, 1, 1]} : vector<4x16x8xf32> to vector<1x16x8xf32>
    %98 = vector.shape_cast %97 : vector<1x16x8xf32> to vector<16x8xf32>
    %99 = arith.truncf %98 : vector<16x8xf32> to vector<16x8xbf16>
    %c0_19 = arith.constant 0 : index
    %c0_20 = arith.constant 0 : index
    %100 = vector.load %arg11[%c0_19, %c0_20] : memref<16x32xbf16, #tpu.memory_space<vmem>>, vector<16x8xbf16>
    tpu.vector_store %arg11[%c0_19, %c0_20], %99 {strides = array<i32>} : memref<16x32xbf16, #tpu.memory_space<vmem>>, vector<16x8xbf16>,
    %101 = vector.extract_strided_slice %96 {offsets = [1, 0, 0], sizes = [1, 16, 8], strides = [1, 1, 1]} : vector<4x16x8xf32> to vector<1x16x8xf32>
    %102 = vector.shape_cast %101 : vector<1x16x8xf32> to vector<16x8xf32>
    %103 = arith.truncf %102 : vector<16x8xf32> to vector<16x8xbf16>
    %c0_21 = arith.constant 0 : index
    %c8 = arith.constant 8 : index
    %104 = vector.load %arg11[%c0_21, %c8] : memref<16x32xbf16, #tpu.memory_space<vmem>>, vector<16x8xbf16>
    tpu.vector_store %arg11[%c0_21, %c8], %103 {strides = array<i32>} : memref<16x32xbf16, #tpu.memory_space<vmem>>, vector<16x8xbf16>,
    %105 = vector.extract_strided_slice %96 {offsets = [2, 0, 0], sizes = [1, 16, 8], strides = [1, 1, 1]} : vector<4x16x8xf32> to vector<1x16x8xf32>
    %106 = vector.shape_cast %105 : vector<1x16x8xf32> to vector<16x8xf32>
    %107 = arith.truncf %106 : vector<16x8xf32> to vector<16x8xbf16>
    %c0_22 = arith.constant 0 : index
    %c16 = arith.constant 16 : index
    %108 = vector.load %arg11[%c0_22, %c16] : memref<16x32xbf16, #tpu.memory_space<vmem>>, vector<16x8xbf16>
    tpu.vector_store %arg11[%c0_22, %c16], %107 {strides = array<i32>} : memref<16x32xbf16, #tpu.memory_space<vmem>>, vector<16x8xbf16>,
    %109 = vector.extract_strided_slice %96 {offsets = [3, 0, 0], sizes = [1, 16, 8], strides = [1, 1, 1]} : vector<4x16x8xf32> to vector<1x16x8xf32>
    %110 = vector.shape_cast %109 : vector<1x16x8xf32> to vector<16x8xf32>
    %111 = arith.truncf %110 : vector<16x8xf32> to vector<16x8xbf16>
    %c0_23 = arith.constant 0 : index
    %c24 = arith.constant 24 : index
    %112 = vector.load %arg11[%c0_23, %c24] : memref<16x32xbf16, #tpu.memory_space<vmem>>, vector<16x8xbf16>
    tpu.vector_store %arg11[%c0_23, %c24], %111 {strides = array<i32>} : memref<16x32xbf16, #tpu.memory_space<vmem>>, vector<16x8xbf16>,
    %c0_24 = arith.constant 0 : index
    %c0_25 = arith.constant 0 : index
    %113 = vector.load %arg11[%c0_24, %c0_25] : memref<16x32xbf16, #tpu.memory_space<vmem>>, vector<16x32xbf16>
    %c0_26 = arith.constant 0 : index
    %c0_27 = arith.constant 0 : index
    %c0_28 = arith.constant 0 : index
    %114 = vector.load %arg5[%c0_26, %c0_27, %c0_28] : memref<1x32x32xbf16, #tpu.memory_space<vmem>>, vector<1x32x32xbf16>
    %115 = vector.shape_cast %114 : vector<1x32x32xbf16> to vector<32x32xbf16>
    %cst_29 = arith.constant dense<0.000000e+00> : vector<16x32xf32>
    %116 = tpu.matmul %113, %115, %cst_29 {dimension_numbers = #tpu.dot_dimension_numbers<[1], [0], [0], [1], [0, 0, 1, 1], [], []>} : vector<16x32xbf16>, vector<32x32xbf16>, vector<16x32xf32> -> vector<16x32xf32>
    %117 = vector.broadcast %13 : vector<1x32xf32> to vector<16x32xf32>
    %118 = arith.addf %116, %117 : vector<16x32xf32>
    %119 = arith.addf %3, %118 : vector<16x32xf32>
    %cst_30 = arith.constant dense<0.000000e+00> : vector<16xf32>
    %120 = vector.multi_reduction <add>, %119, %cst_30 [1] : vector<16x32xf32> to vector<16xf32>
    %121 = vector.shape_cast %120 : vector<16xf32> to vector<16x1xf32>
    %cst_31 = arith.constant 3.200000e+01 : f32
    %122 = vector.broadcast %cst_31 : f32 to vector<16x1xf32>
    %123 = arith.divf %121, %122 : vector<16x1xf32>
    %124 = vector.broadcast %123 : vector<16x1xf32> to vector<16x32xf32>
    %125 = arith.subf %119, %124 : vector<16x32xf32>
    %126 = arith.mulf %125, %125 : vector<16x32xf32>
    %cst_32 = arith.constant dense<0.000000e+00> : vector<16xf32>
    %127 = vector.multi_reduction <add>, %126, %cst_32 [1] : vector<16x32xf32> to vector<16xf32>
    %128 = vector.shape_cast %127 : vector<16xf32> to vector<16x1xf32>
    %cst_33 = arith.constant 3.200000e+01 : f32
    %129 = vector.broadcast %cst_33 : f32 to vector<16x1xf32>
    %130 = arith.divf %128, %129 : vector<16x1xf32>
    %131 = vector.broadcast %123 : vector<16x1xf32> to vector<16x32xf32>
    %132 = arith.subf %119, %131 : vector<16x32xf32>
    %cst_34 = arith.constant 9.99999974E-6 : f32
    %133 = vector.broadcast %cst_34 : f32 to vector<16x1xf32>
    %134 = arith.addf %130, %133 : vector<16x1xf32>
    %135 = math.rsqrt %134 : vector<16x1xf32>
    %136 = vector.broadcast %135 : vector<16x1xf32> to vector<16x32xf32>
    %137 = arith.mulf %132, %136 : vector<16x32xf32>
    %138 = vector.broadcast %8 : vector<1x32xf32> to vector<16x32xf32>
    %139 = arith.mulf %137, %138 : vector<16x32xf32>
    %140 = vector.broadcast %9 : vector<1x32xf32> to vector<16x32xf32>
    %141 = arith.addf %139, %140 : vector<16x32xf32>
    %142 = arith.truncf %141 : vector<16x32xf32> to vector<16x32xbf16>
    %c0_35 = arith.constant 0 : index
    %c0_36 = arith.constant 0 : index
    %c0_37 = arith.constant 0 : index
    %143 = vector.load %arg6[%c0_35, %c0_36, %c0_37] : memref<1x32x128xbf16, #tpu.memory_space<vmem>>, vector<1x32x128xbf16>
    %144 = vector.shape_cast %143 : vector<1x32x128xbf16> to vector<32x128xbf16>
    %cst_38 = arith.constant dense<0.000000e+00> : vector<16x128xf32>
    %145 = tpu.matmul %142, %144, %cst_38 {dimension_numbers = #tpu.dot_dimension_numbers<[1], [0], [0], [1], [0, 0, 1, 1], [], []>} : vector<16x32xbf16>, vector<32x128xbf16>, vector<16x128xf32> -> vector<16x128xf32>
    %c0_39 = arith.constant 0 : index
    %c0_40 = arith.constant 0 : index
    %c0_41 = arith.constant 0 : index
    %146 = vector.load %arg7[%c0_39, %c0_40, %c0_41] : memref<1x1x128xf32, #tpu.memory_space<vmem>>, vector<1x1x128xf32>
    %147 = vector.shape_cast %146 : vector<1x1x128xf32> to vector<1x128xf32>
    %148 = vector.broadcast %147 : vector<1x128xf32> to vector<16x128xf32>
    %149 = arith.addf %145, %148 : vector<16x128xf32>
    %cst_42 = arith.constant 1.702000e+00 : f32
    %150 = vector.broadcast %cst_42 : f32 to vector<16x128xf32>
    %151 = arith.mulf %150, %149 : vector<16x128xf32>
    %152 = arith.negf %151 : vector<16x128xf32>
    %153 = math.exp %152 : vector<16x128xf32>
    %cst_43 = arith.constant 1.000000e+00 : f32
    %154 = vector.broadcast %cst_43 : f32 to vector<16x128xf32>
    %155 = arith.addf %154, %153 : vector<16x128xf32>
    %156 = arith.divf %154, %155 : vector<16x128xf32>
    %157 = arith.mulf %149, %156 : vector<16x128xf32>
    %158 = arith.truncf %157 : vector<16x128xf32> to vector<16x128xbf16>
    %c0_44 = arith.constant 0 : index
    %c0_45 = arith.constant 0 : index
    %c0_46 = arith.constant 0 : index
    %159 = vector.load %arg8[%c0_44, %c0_45, %c0_46] : memref<1x128x32xbf16, #tpu.memory_space<vmem>>, vector<1x128x32xbf16>
    %160 = vector.shape_cast %159 : vector<1x128x32xbf16> to vector<128x32xbf16>
    %cst_47 = arith.constant dense<0.000000e+00> : vector<16x32xf32>
    %161 = tpu.matmul %158, %160, %cst_47 {dimension_numbers = #tpu.dot_dimension_numbers<[1], [0], [0], [1], [0, 0, 1, 1], [], []>} : vector<16x128xbf16>, vector<128x32xbf16>, vector<16x32xf32> -> vector<16x32xf32>
    %162 = vector.broadcast %14 : vector<1x32xf32> to vector<16x32xf32>
    %163 = arith.addf %161, %162 : vector<16x32xf32>
    %164 = arith.addf %119, %163 : vector<16x32xf32>
    %c0_48 = arith.constant 0 : index
    %c0_49 = arith.constant 0 : index
    %165 = vector.load %arg10[%c0_48, %c0_49] : memref<16x32xf32, #tpu.memory_space<vmem>>, vector<16x32xf32>
    tpu.vector_store %arg10[%c0_48, %c0_49], %164 {strides = array<i32>} : memref<16x32xf32, #tpu.memory_space<vmem>>, vector<16x32xf32>,
    %c1_i32 = arith.constant 1 : i32
    %166 = arith.cmpi eq, %arg0, %c1_i32 : i32
    %167 = arith.extui %166 : i1 to i32
    %c0_i32_50 = arith.constant 0 : i32
    %168 = arith.cmpi ne, %167, %c0_i32_50 : i32
    scf.if %168 {
      %169 = vector.extract_strided_slice %5 {offsets = [9, 0], sizes = [1, 32], strides = [1, 1]} : vector<16x32xf32> to vector<1x32xf32>
      %170 = vector.extract_strided_slice %5 {offsets = [10, 0], sizes = [1, 32], strides = [1, 1]} : vector<16x32xf32> to vector<1x32xf32>
      %cst_51 = arith.constant dense<0.000000e+00> : vector<16xf32>
      %171 = vector.multi_reduction <add>, %164, %cst_51 [1] : vector<16x32xf32> to vector<16xf32>
      %172 = vector.shape_cast %171 : vector<16xf32> to vector<16x1xf32>
      %cst_52 = arith.constant 3.200000e+01 : f32
      %173 = vector.broadcast %cst_52 : f32 to vector<16x1xf32>
      %174 = arith.divf %172, %173 : vector<16x1xf32>
      %175 = vector.broadcast %174 : vector<16x1xf32> to vector<16x32xf32>
      %176 = arith.subf %164, %175 : vector<16x32xf32>
      %177 = arith.mulf %176, %176 : vector<16x32xf32>
      %cst_53 = arith.constant dense<0.000000e+00> : vector<16xf32>
      %178 = vector.multi_reduction <add>, %177, %cst_53 [1] : vector<16x32xf32> to vector<16xf32>
      %179 = vector.shape_cast %178 : vector<16xf32> to vector<16x1xf32>
      %cst_54 = arith.constant 3.200000e+01 : f32
      %180 = vector.broadcast %cst_54 : f32 to vector<16x1xf32>
      %181 = arith.divf %179, %180 : vector<16x1xf32>
      %182 = vector.broadcast %174 : vector<16x1xf32> to vector<16x32xf32>
      %183 = arith.subf %164, %182 : vector<16x32xf32>
      %cst_55 = arith.constant 9.99999974E-6 : f32
      %184 = vector.broadcast %cst_55 : f32 to vector<16x1xf32>
      %185 = arith.addf %181, %184 : vector<16x1xf32>
      %186 = math.rsqrt %185 : vector<16x1xf32>
      %187 = vector.broadcast %186 : vector<16x1xf32> to vector<16x32xf32>
      %188 = arith.mulf %183, %187 : vector<16x32xf32>
      %189 = vector.broadcast %169 : vector<1x32xf32> to vector<16x32xf32>
      %190 = arith.mulf %188, %189 : vector<16x32xf32>
      %191 = vector.broadcast %170 : vector<1x32xf32> to vector<16x32xf32>
      %192 = arith.addf %190, %191 : vector<16x32xf32>
      %c0_56 = arith.constant 0 : index
      %c0_57 = arith.constant 0 : index
      %193 = vector.load %arg9[%c0_56, %c0_57] : memref<16x32xf32, #tpu.memory_space<vmem>>, vector<16x32xf32>
      tpu.vector_store %arg9[%c0_56, %c0_57], %192 {strides = array<i32>} : memref<16x32xf32, #tpu.memory_space<vmem>>, vector<16x32xf32>,
    } else {
    }
    return
  }
  func.func @transform_0(%arg0: i32) -> (i32, i32) {
    %c0_i32 = arith.constant 0 : i32
    %c0_i32_0 = arith.constant 0 : i32
    %c0_i32_1 = arith.constant 0 : i32
    return %c0_i32, %c0_i32_0 : i32, i32
  }
  func.func @transform_1(%arg0: i32) -> (i32, i32) {
    %c0_i32 = arith.constant 0 : i32
    %c0_i32_0 = arith.constant 0 : i32
    %c0_i32_1 = arith.constant 0 : i32
    return %c0_i32, %c0_i32_0 : i32, i32
  }
  func.func @transform_2(%arg0: i32) -> (i32, i32, i32) {
    %c0_i32 = arith.constant 0 : i32
    %c0_i32_0 = arith.constant 0 : i32
    %c0_i32_1 = arith.constant 0 : i32
    return %arg0, %c0_i32, %c0_i32_0 : i32, i32, i32
  }
  func.func @transform_3(%arg0: i32) -> (i32, i32, i32) {
    %c0_i32 = arith.constant 0 : i32
    %c0_i32_0 = arith.constant 0 : i32
    %c0_i32_1 = arith.constant 0 : i32
    return %arg0, %c0_i32, %c0_i32_0 : i32, i32, i32
  }
  func.func @transform_4(%arg0: i32) -> (i32, i32, i32) {
    %c0_i32 = arith.constant 0 : i32
    %c0_i32_0 = arith.constant 0 : i32
    %c0_i32_1 = arith.constant 0 : i32
    return %arg0, %c0_i32, %c0_i32_0 : i32, i32, i32
  }
  func.func @transform_5(%arg0: i32) -> (i32, i32, i32) {
    %c0_i32 = arith.constant 0 : i32
    %c0_i32_0 = arith.constant 0 : i32
    %c0_i32_1 = arith.constant 0 : i32
    return %arg0, %c0_i32, %c0_i32_0 : i32, i32, i32
  }
  func.func @transform_6(%arg0: i32) -> (i32, i32, i32) {
    %c0_i32 = arith.constant 0 : i32
    %c0_i32_0 = arith.constant 0 : i32
    %c0_i32_1 = arith.constant 0 : i32
    return %arg0, %c0_i32, %c0_i32_0 : i32, i32, i32
  }
  func.func @transform_7(%arg0: i32) -> (i32, i32, i32) {
    %c0_i32 = arith.constant 0 : i32
    %c0_i32_0 = arith.constant 0 : i32
    %c0_i32_1 = arith.constant 0 : i32
    return %arg0, %c0_i32, %c0_i32_0 : i32, i32, i32
  }
  func.func @transform_8(%arg0: i32) -> (i32, i32) {
    %c0_i32 = arith.constant 0 : i32
    %c0_i32_0 = arith.constant 0 : i32
    %c0_i32_1 = arith.constant 0 : i32
    return %c0_i32, %c0_i32_0 : i32, i32
  }
}

</mosaic_0001>

<llo_original>
// kernel: tpu_custom_call.1
$region0: #{tpu_custom_call.1}
  #allocation0 [shape = 'u32[]', space=smem, size = 0x4, offset = 0x4, fixed_abs, tag = 'smem constant byte address 0x4 - core index']
  #allocation1 [shape = 'u32[144,128]{1,0:T(1,128)}', space=vmem, size = 0x12000, scoped, tag = 'internal scratch']
  #allocation2 [shape = 'f32[16,32]{1,0:T(8,128)}', space=vmem, size = 0x2000, scoped, tag = 'scratch operand']
  #allocation3 [shape = 'bf16[16,32]{1,0:T(16,128)(2,1)}', space=vmem, size = 0x1000, scoped, tag = 'scratch operand']
  %s0 = inlined_call_operand.vmem [shape: f32[16,32], index: 0, kind: input, shape index: {}]
  %s1 = inlined_call_operand.vmem [shape: f32[16,16], index: 1, kind: input, shape index: {}]
  %s2 = inlined_call_operand.vmem [shape: f32[2,16,32], index: 2, kind: input, shape index: {}]
  %s3 = inlined_call_operand.vmem [shape: bf16[2,32,96], index: 3, kind: input, shape index: {}]
  %s4 = inlined_call_operand.vmem [shape: bf16[2,32,32], index: 4, kind: input, shape index: {}]
  %s5 = inlined_call_operand.vmem [shape: bf16[2,32,128], index: 5, kind: input, shape index: {}]
  %s6 = inlined_call_operand.vmem [shape: f32[2,1,128], index: 6, kind: input, shape index: {}]
  %s7 = inlined_call_operand.vmem [shape: bf16[2,128,32], index: 7, kind: input, shape index: {}]
  %s8 = inlined_call_operand.hbm [shape: f32[16,32], index: 8, kind: output, shape index: {}]
  %s9 = sld [smem:[#allocation0]]
  $region73: #{tpu_custom_call.1} parent=0
    _
  %s11 = ssub.s32 1, %s9
  %s12 = scalar_select 0, %s11, %s9
  $region1: #{tpu_custom_call.1} parent=0
    #allocation4 [shape = 'u8[8192]{0}', space=vmem, size = 0x2000, scoped, tag = 'output window, operand 0, single buffered']
    #allocation5 [shape = 's32[2]{0}', space=sflag, size = 0x8, scoped, tag = 'scoped memory for tpu_custom_call.1']
    %13 = vsyncpa [#allocation5], 0
    loop: start=0, step=1, limit=4
    $region2: #{tpu_custom_call.1} parent=1 // loop_pre_header
      _
    $region3: #{tpu_custom_call.1} parent=1 // loop_header
      %s15 = sphi 0, %s19
      %p16 = scmp.ge.s32.totalorder %s15, 4
      %s23 = sphi 0, %s23
      %s25 = sphi 0, %s23
      %s26 = sphi 0, %s25
      %s40 = sphi 0, %s26
      %s44 = sphi 0, %s44
      %s46 = sphi 0, %s44
      %s47 = sphi 0, %s46
      %s61 = sphi 0, %s47
      %s67 = sphi 0, %s69
      %s70 = sphi 0, %s67
      %s71 = sphi 0, %s70
      %s87 = sphi 0, %s71
      %s93 = sphi 0, %s95
      %s96 = sphi 0, %s93
      %s97 = sphi 0, %s96
      %s113 = sphi 0, %s97
      %s119 = sphi 0, %s121
      %s122 = sphi 0, %s119
      %s123 = sphi 0, %s122
      %s139 = sphi 0, %s123
      %s145 = sphi 0, %s147
      %s148 = sphi 0, %s145
      %s149 = sphi 0, %s148
      %s165 = sphi 0, %s149
      %s171 = sphi 0, %s173
      %s174 = sphi 0, %s171
      %s175 = sphi 0, %s174
      %s191 = sphi 0, %s175
      %s197 = sphi 0, %s199
      %s200 = sphi 0, %s197
      %s201 = sphi 0, %s200
      %s217 = sphi 0, %s201
      %s221 = sphi 0, %s221
      %s223 = sphi 0, %s221
      %s224 = sphi 0, %s223
      %s238 = sphi 0, %s224
    $region4: #{tpu_custom_call.1} parent=1 // loop_header_branch
      %18 = sbr.rel (%p16) target = $region8
    $region5: #{tpu_custom_call.1} parent=1 // loop_body
      %s20 = ssub.s32 %s15, 1
      %s21 = ssub.s32 %s15, 2
      %s22 = sadd.s32 %s15, 1
      %s24 = sadd.s32 %s23, 1
      %p27 = scmp.eq.s32.totalorder %s15, 1
      %p28 = scmp.ne.s32.totalorder %s23, %s25
      %p29 = scmp.eq.s32.totalorder %s15, 0
      %p30 = por %p28, %p29
      %p31 = scmp.ne.s32.totalorder %s23, %s25
      %p32 = scmp.eq.s32.totalorder %s20, 1
      %p33 = por %p31, %p32
      %p34 = scmp.ne.s32.totalorder %s25, %s26
      %p35 = scmp.eq.s32.totalorder %s20, 0
      %p36 = por %p34, %p35
      %p37 = scmp.ne.s32.totalorder %s25, %s26
      %p38 = scmp.eq.s32.totalorder %s21, 1
      %p39 = por %p37, %p38
      %p41 = scmp.ne.s32.totalorder %s26, %s40
      %p42 = scmp.eq.s32.totalorder %s21, 0
      %p43 = por %p41, %p42
      %s45 = sadd.s32 %s44, 1
      %p48 = scmp.eq.s32.totalorder %s15, 1
      %p49 = scmp.ne.s32.totalorder %s44, %s46
      %p50 = scmp.eq.s32.totalorder %s15, 0
      %p51 = por %p49, %p50
      %p52 = scmp.ne.s32.totalorder %s44, %s46
      %p53 = scmp.eq.s32.totalorder %s20, 1
      %p54 = por %p52, %p53
      %p55 = scmp.ne.s32.totalorder %s46, %s47
      %p56 = scmp.eq.s32.totalorder %s20, 0
      %p57 = por %p55, %p56
      %p58 = scmp.ne.s32.totalorder %s46, %s47
      %p59 = scmp.eq.s32.totalorder %s21, 1
      %p60 = por %p58, %p59
      %p62 = scmp.ne.s32.totalorder %s47, %s61
      %p63 = scmp.eq.s32.totalorder %s21, 0
      %p64 = por %p62, %p63
      %s65 = ssub.s32 %s15, %s22
      %p66 = scmp.eq.s32.totalorder %s65, 0
      %s68 = sadd.s32 %s67, 1
      %s69 = scalar_select %p66, %s67, %s68
      %p72 = pneg %p66
      %p73 = scmp.eq.s32.totalorder %s15, 1
      %p74 = por %p72, %p73
      %p75 = scmp.ne.s32.totalorder %s67, %s70
      %p76 = scmp.eq.s32.totalorder %s15, 0
      %p77 = por %p75, %p76
      %p78 = scmp.ne.s32.totalorder %s67, %s70
      %p79 = scmp.eq.s32.totalorder %s20, 1
      %p80 = por %p78, %p79
      %p81 = scmp.ne.s32.totalorder %s70, %s71
      %p82 = scmp.eq.s32.totalorder %s20, 0
      %p83 = por %p81, %p82
      %p84 = scmp.ne.s32.totalorder %s70, %s71
      %p85 = scmp.eq.s32.totalorder %s21, 1
      %p86 = por %p84, %p85
      %p88 = scmp.ne.s32.totalorder %s71, %s87
      %p89 = scmp.eq.s32.totalorder %s21, 0
      %p90 = por %p88, %p89
      %s91 = ssub.s32 %s15, %s22
      %p92 = scmp.eq.s32.totalorder %s91, 0
      %s94 = sadd.s32 %s93, 1
      %s95 = scalar_select %p92, %s93, %s94
      %p98 = pneg %p92
      %p99 = scmp.eq.s32.totalorder %s15, 1
      %p100 = por %p98, %p99
      %p101 = scmp.ne.s32.totalorder %s93, %s96
      %p102 = scmp.eq.s32.totalorder %s15, 0
      %p103 = por %p101, %p102
      %p104 = scmp.ne.s32.totalorder %s93, %s96
      %p105 = scmp.eq.s32.totalorder %s20, 1
      %p106 = por %p104, %p105
      %p107 = scmp.ne.s32.totalorder %s96, %s97
      %p108 = scmp.eq.s32.totalorder %s20, 0
      %p109 = por %p107, %p108
      %p110 = scmp.ne.s32.totalorder %s96, %s97
      %p111 = scmp.eq.s32.totalorder %s21, 1
      %p112 = por %p110, %p111
      %p114 = scmp.ne.s32.totalorder %s97, %s113
      %p115 = scmp.eq.s32.totalorder %s21, 0
      %p116 = por %p114, %p115
      %s117 = ssub.s32 %s15, %s22
      %p118 = scmp.eq.s32.totalorder %s117, 0
      %s120 = sadd.s32 %s119, 1
      %s121 = scalar_select %p118, %s119, %s120
      %p124 = pneg %p118
      %p125 = scmp.eq.s32.totalorder %s15, 1
      %p126 = por %p124, %p125
      %p127 = scmp.ne.s32.totalorder %s119, %s122
      %p128 = scmp.eq.s32.totalorder %s15, 0
      %p129 = por %p127, %p128
      %p130 = scmp.ne.s32.totalorder %s119, %s122
      %p131 = scmp.eq.s32.totalorder %s20, 1
      %p132 = por %p130, %p131
      %p133 = scmp.ne.s32.totalorder %s122, %s123
      %p134 = scmp.eq.s32.totalorder %s20, 0
      %p135 = por %p133, %p134
      %p136 = scmp.ne.s32.totalorder %s122, %s123
      %p137 = scmp.eq.s32.totalorder %s21, 1
      %p138 = por %p136, %p137
      %p140 = scmp.ne.s32.totalorder %s123, %s139
      %p141 = scmp.eq.s32.totalorder %s21, 0
      %p142 = por %p140, %p141
      %s143 = ssub.s32 %s15, %s22
      %p144 = scmp.eq.s32.totalorder %s143, 0
      %s146 = sadd.s32 %s145, 1
      %s147 = scalar_select %p144, %s145, %s146
      %p150 = pneg %p144
      %p151 = scmp.eq.s32.totalorder %s15, 1
      %p152 = por %p150, %p151
      %p153 = scmp.ne.s32.totalorder %s145, %s148
      %p154 = scmp.eq.s32.totalorder %s15, 0
      %p155 = por %p153, %p154
      %p156 = scmp.ne.s32.totalorder %s145, %s148
      %p157 = scmp.eq.s32.totalorder %s20, 1
      %p158 = por %p156, %p157
      %p159 = scmp.ne.s32.totalorder %s148, %s149
      %p160 = scmp.eq.s32.totalorder %s20, 0
      %p161 = por %p159, %p160
      %p162 = scmp.ne.s32.totalorder %s148, %s149
      %p163 = scmp.eq.s32.totalorder %s21, 1
      %p164 = por %p162, %p163
      %p166 = scmp.ne.s32.totalorder %s149, %s165
      %p167 = scmp.eq.s32.totalorder %s21, 0
      %p168 = por %p166, %p167
      %s169 = ssub.s32 %s15, %s22
      %p170 = scmp.eq.s32.totalorder %s169, 0
      %s172 = sadd.s32 %s171, 1
      %s173 = scalar_select %p170, %s171, %s172
      %p176 = pneg %p170
      %p177 = scmp.eq.s32.totalorder %s15, 1
      %p178 = por %p176, %p177
      %p179 = scmp.ne.s32.totalorder %s171, %s174
      %p180 = scmp.eq.s32.totalorder %s15, 0
      %p181 = por %p179, %p180
      %p182 = scmp.ne.s32.totalorder %s171, %s174
      %p183 = scmp.eq.s32.totalorder %s20, 1
      %p184 = por %p182, %p183
      %p185 = scmp.ne.s32.totalorder %s174, %s175
      %p186 = scmp.eq.s32.totalorder %s20, 0
      %p187 = por %p185, %p186
      %p188 = scmp.ne.s32.totalorder %s174, %s175
      %p189 = scmp.eq.s32.totalorder %s21, 1
      %p190 = por %p188, %p189
      %p192 = scmp.ne.s32.totalorder %s175, %s191
      %p193 = scmp.eq.s32.totalorder %s21, 0
      %p194 = por %p192, %p193
      %s195 = ssub.s32 %s15, %s22
      %p196 = scmp.eq.s32.totalorder %s195, 0
      %s198 = sadd.s32 %s197, 1
      %s199 = scalar_select %p196, %s197, %s198
      %p202 = pneg %p196
      %p203 = scmp.eq.s32.totalorder %s15, 1
      %p204 = por %p202, %p203
      %p205 = scmp.ne.s32.totalorder %s197, %s200
      %p206 = scmp.eq.s32.totalorder %s15, 0
      %p207 = por %p205, %p206
      %p208 = scmp.ne.s32.totalorder %s197, %s200
      %p209 = scmp.eq.s32.totalorder %s20, 1
      %p210 = por %p208, %p209
      %p211 = scmp.ne.s32.totalorder %s200, %s201
      %p212 = scmp.eq.s32.totalorder %s20, 0
      %p213 = por %p211, %p212
      %p214 = scmp.ne.s32.totalorder %s200, %s201
      %p215 = scmp.eq.s32.totalorder %s21, 1
      %p216 = por %p214, %p215
      %p218 = scmp.ne.s32.totalorder %s201, %s217
      %p219 = scmp.eq.s32.totalorder %s21, 0
      %p220 = por %p218, %p219
      %s222 = sadd.s32 %s221, 1
      %p225 = scmp.eq.s32.totalorder %s15, 1
      %p226 = scmp.ne.s32.totalorder %s221, %s223
      %p227 = scmp.eq.s32.totalorder %s15, 0
      %p228 = por %p226, %p227
      %p229 = scmp.ne.s32.totalorder %s221, %s223
      %p230 = scmp.eq.s32.totalorder %s20, 1
      %p231 = por %p229, %p230
      %p232 = scmp.ne.s32.totalorder %s223, %s224
      %p233 = scmp.eq.s32.totalorder %s20, 0
      %p234 = por %p232, %p233
      %p235 = scmp.ne.s32.totalorder %s223, %s224
      %p236 = scmp.eq.s32.totalorder %s21, 1
      %p237 = por %p235, %p236
      %p239 = scmp.ne.s32.totalorder %s224, %s238
      %p240 = scmp.eq.s32.totalorder %s21, 0
      %p241 = por %p239, %p240
      %p242 = scmp.le.s32.totalorder 1, %s15
      %p243 = scmp.lt.s32.totalorder %s15, 3
      %p244 = pnand %p242, %p243
      %p245 = pneg %p244
      // Predicated region
      $region9: #{tpu_custom_call.1} parent=5 // pred_check
        _
      $region10: #{tpu_custom_call.1} parent=5 // pred_check_branch
        %247 = sbr.rel (%p244) target = $region12
      $region11: #{tpu_custom_call.1} parent=5 // pred_region
        %s248 = ssub.s32 %s15, 1
        // Predicated region
        $region13: #{tpu_custom_call.1} parent=11 // pred_check
          %p249 = pneg %p36
        $region14: #{tpu_custom_call.1} parent=11 // pred_check_branch
          %251 = sbr.rel (%p249) target = $region16
        $region15: #{tpu_custom_call.1} parent=11 // pred_region
          _
        $region16: #{tpu_custom_call.1} parent=11 // pred_fallthru
          _
        // Predicated region
        $region17: #{tpu_custom_call.1} parent=11 // pred_check
          %p252 = pneg %p57
        $region18: #{tpu_custom_call.1} parent=11 // pred_check_branch
          %254 = sbr.rel (%p252) target = $region20
        $region19: #{tpu_custom_call.1} parent=11 // pred_region
          _
        $region20: #{tpu_custom_call.1} parent=11 // pred_fallthru
          _
      $region12: #{tpu_custom_call.1} parent=5 // pred_fallthru
        _
      %p255 = scmp.lt.s32.totalorder %s15, 2
      // Predicated region
      $region21: #{tpu_custom_call.1} parent=5 // pred_check
        %p256 = pneg %p255
      $region22: #{tpu_custom_call.1} parent=5 // pred_check_branch
        %258 = sbr.rel (%p256) target = $region24
      $region23: #{tpu_custom_call.1} parent=5 // pred_region
        // Predicated region
        $region25: #{tpu_custom_call.1} parent=23 // pred_check
          %p259 = pneg %p77
        $region26: #{tpu_custom_call.1} parent=23 // pred_check_branch
          %261 = sbr.rel (%p259) target = $region28
        $region27: #{tpu_custom_call.1} parent=23 // pred_region
          %p262 = scmp.lt.s32.totalorder %s15, 1
          %s263 = scalar_select %p262, %s15, 1
          %s264 = smul.addr %s263, 2
          %s265 = smul.addr %s264, 8
          %s266 = scalar_lea.vmem %s2, %s265
        $region28: #{tpu_custom_call.1} parent=23 // pred_fallthru
          _
        // Predicated region
        $region29: #{tpu_custom_call.1} parent=23 // pred_check
          %p267 = pneg %p103
        $region30: #{tpu_custom_call.1} parent=23 // pred_check_branch
          %269 = sbr.rel (%p267) target = $region32
        $region31: #{tpu_custom_call.1} parent=23 // pred_region
          %p270 = scmp.lt.s32.totalorder %s15, 1
          %s271 = scalar_select %p270, %s15, 1
          %s272 = smul.addr %s271, 4
          %s273 = smul.addr %s272, 4
          %s274 = scalar_lea.vmem %s3, %s273
        $region32: #{tpu_custom_call.1} parent=23 // pred_fallthru
          _
        // Predicated region
        $region33: #{tpu_custom_call.1} parent=23 // pred_check
          %p275 = pneg %p129
        $region34: #{tpu_custom_call.1} parent=23 // pred_check_branch
          %277 = sbr.rel (%p275) target = $region36
        $region35: #{tpu_custom_call.1} parent=23 // pred_region
          %p278 = scmp.lt.s32.totalorder %s15, 1
          %s279 = scalar_select %p278, %s15, 1
          %s280 = smul.addr %s279, 4
          %s281 = smul.addr %s280, 4
          %s282 = scalar_lea.vmem %s4, %s281
        $region36: #{tpu_custom_call.1} parent=23 // pred_fallthru
          _
        // Predicated region
        $region37: #{tpu_custom_call.1} parent=23 // pred_check
          %p283 = pneg %p155
        $region38: #{tpu_custom_call.1} parent=23 // pred_check_branch
          %285 = sbr.rel (%p283) target = $region40
        $region39: #{tpu_custom_call.1} parent=23 // pred_region
          %p286 = scmp.lt.s32.totalorder %s15, 1
          %s287 = scalar_select %p286, %s15, 1
          %s288 = smul.addr %s287, 4
          %s289 = smul.addr %s288, 4
          %s290 = scalar_lea.vmem %s5, %s289
        $region40: #{tpu_custom_call.1} parent=23 // pred_fallthru
          _
        // Predicated region
        $region41: #{tpu_custom_call.1} parent=23 // pred_check
          %p291 = pneg %p181
        $region42: #{tpu_custom_call.1} parent=23 // pred_check_branch
          %293 = sbr.rel (%p291) target = $region44
        $region43: #{tpu_custom_call.1} parent=23 // pred_region
          %p294 = scmp.lt.s32.totalorder %s15, 1
          %s295 = scalar_select %p294, %s15, 1
          %s296 = scalar_lea.vmem %s6, %s295
        $region44: #{tpu_custom_call.1} parent=23 // pred_fallthru
          _
        // Predicated region
        $region45: #{tpu_custom_call.1} parent=23 // pred_check
          %p297 = pneg %p207
        $region46: #{tpu_custom_call.1} parent=23 // pred_check_branch
          %299 = sbr.rel (%p297) target = $region48
        $region47: #{tpu_custom_call.1} parent=23 // pred_region
          %p300 = scmp.lt.s32.totalorder %s15, 1
          %s301 = scalar_select %p300, %s15, 1
          %s302 = smul.addr %s301, 16
          %s303 = smul.addr %s302, 4
          %s304 = scalar_lea.vmem %s7, %s303
        $region48: #{tpu_custom_call.1} parent=23 // pred_fallthru
          _
      $region24: #{tpu_custom_call.1} parent=5 // pred_fallthru
        _
      %p305 = scmp.le.s32.totalorder 1, %s15
      %p306 = scmp.lt.s32.totalorder %s15, 3
      %p307 = pnand %p305, %p306
      %p308 = pneg %p307
      // Predicated region
      $region49: #{tpu_custom_call.1} parent=5 // pred_check
        _
      $region50: #{tpu_custom_call.1} parent=5 // pred_check_branch
        %310 = sbr.rel (%p307) target = $region52
      $region51: #{tpu_custom_call.1} parent=5 // pred_region
        %s311 = ssub.s32 %s15, 1
        %p312 = pneg %p36
        %p313 = pneg %p33
        %p314 = pneg %p57
        %p315 = pneg %p54
        %p316 = scmp.lt.s32.totalorder %s20, 1
        %s317 = scalar_select %p316, %s20, 1
        %s318 = smul.addr %s317, 2
        %s319 = smul.addr %s318, 8
        %s320 = scalar_lea.vmem %s2, %s319
        %p321 = pneg %p83
        %p322 = pneg %p80
        %p323 = scmp.lt.s32.totalorder %s20, 1
        %s324 = scalar_select %p323, %s20, 1
        %s325 = smul.addr %s324, 4
        %s326 = smul.addr %s325, 4
        %s327 = scalar_lea.vmem %s3, %s326
        %p328 = pneg %p109
        %p329 = pneg %p106
        %p330 = scmp.lt.s32.totalorder %s20, 1
        %s331 = scalar_select %p330, %s20, 1
        %s332 = smul.addr %s331, 4
        %s333 = smul.addr %s332, 4
        %s334 = scalar_lea.vmem %s4, %s333
        %p335 = pneg %p135
        %p336 = pneg %p132
        %p337 = scmp.lt.s32.totalorder %s20, 1
        %s338 = scalar_select %p337, %s20, 1
        %s339 = smul.addr %s338, 4
        %s340 = smul.addr %s339, 4
        %s341 = scalar_lea.vmem %s5, %s340
        %p342 = pneg %p161
        %p343 = pneg %p158
        %p344 = scmp.lt.s32.totalorder %s20, 1
        %s345 = scalar_select %p344, %s20, 1
        %s346 = scalar_lea.vmem %s6, %s345
        %p347 = pneg %p187
        %p348 = pneg %p184
        %p349 = scmp.lt.s32.totalorder %s20, 1
        %s350 = scalar_select %p349, %s20, 1
        %s351 = smul.addr %s350, 16
        %s352 = smul.addr %s351, 4
        %s353 = scalar_lea.vmem %s7, %s352
        %p354 = pneg %p213
        %p355 = pneg %p210
        %p356 = pneg %p234
        %p357 = pneg %p231
        %p358 = scmp.lt.s32.totalorder %s20, 1
        %s359 = scalar_select %p358, %s20, 1
        %s360 = smul.addr %s359, 2
        %s361 = smul.addr %s360, 8
        %s362 = scalar_lea.vmem %s2, %s361
        %p363 = scmp.lt.s32.totalorder %s20, 1
        %s364 = scalar_select %p363, %s20, 1
        %s365 = smul.addr %s364, 4
        %s366 = smul.addr %s365, 4
        %s367 = scalar_lea.vmem %s3, %s366
        %p368 = scmp.lt.s32.totalorder %s20, 1
        %s369 = scalar_select %p368, %s20, 1
        %s370 = smul.addr %s369, 4
        %s371 = smul.addr %s370, 4
        %s372 = scalar_lea.vmem %s4, %s371
        %p373 = scmp.lt.s32.totalorder %s20, 1
        %s374 = scalar_select %p373, %s20, 1
        %s375 = smul.addr %s374, 4
        %s376 = smul.addr %s375, 4
        %s377 = scalar_lea.vmem %s5, %s376
        %p378 = scmp.lt.s32.totalorder %s20, 1
        %s379 = scalar_select %p378, %s20, 1
        %s380 = scalar_lea.vmem %s6, %s379
        %p381 = scmp.lt.s32.totalorder %s20, 1
        %s382 = scalar_select %p381, %s20, 1
        %s383 = smul.addr %s382, 16
        %s384 = smul.addr %s383, 4
        %s385 = scalar_lea.vmem %s7, %s384
        %p387 = scmp.eq.s32.totalorder %s20, 0
        // Predicated region
        $region53: #{tpu_custom_call.1} parent=51 // pred_check
          %p388 = pneg %p387
        $region54: #{tpu_custom_call.1} parent=51 // pred_check_branch
          %390 = sbr.rel (%p388) target = $region56
        $region55: #{tpu_custom_call.1} parent=51 // pred_region
          %v391 = vld [vmem:[%s0] sm:$0xff]
          %v392 = vld [vmem:[%s0 + $0x8] sm:$0xff]
          %vm393 = vcmask 261120
          %394 = vst.msk [vmem:[#allocation2] sm:$0xff] %vm393, %v391
          %395 = vst.msk [vmem:[#allocation2 + $0x8] sm:$0xff] %vm393, %v392
        $region56: #{tpu_custom_call.1} parent=51 // pred_fallthru
          _
        %v396 = vld [vmem:[#allocation2] sm:$0xff]
        %v397 = vld [vmem:[#allocation2 + $0x8] sm:$0xff]
        %v398 = vld [vmem:[%s362] sm:$0xff]
        %v399 = vld [vmem:[%s362 + $0x8] sm:$0xff]
        %vm400 = vcmask 261120
        %v401 = vsel %vm400, %v396, 0.0
        %402 = vadd.xlane.f32.xlu0 %v401
        %v403 = vpop.xlane.xlu0 %402
        %v404 = vsel %vm400, %v397, 0.0
        %405 = vadd.xlane.f32.xlu0 %v404
        %v406 = vpop.xlane.xlu0 %405
        %v407 = vrcp.pop 32.0
        %v408 = vmul.f32 %v403, %v407
        %v409 = vmul.f32 %v406, %v407
        %v410 = vsub.f32 %v396, %v408
        %v411 = vsub.f32 %v397, %v409
        %v412 = vmul.f32 %v410, %v410
        %v413 = vmul.f32 %v411, %v411
        %v414 = vsel %vm400, %v412, 0.0
        %415 = vadd.xlane.f32.xlu0 %v414
        %v416 = vpop.xlane.xlu0 %415
        %v417 = vsel %vm400, %v413, 0.0
        %418 = vadd.xlane.f32.xlu0 %v417
        %v419 = vpop.xlane.xlu0 %418
        %v420 = vmul.f32 %v416, %v407
        %v421 = vmul.f32 %v419, %v407
        %v422 = vadd.f32 %v420, 1e-05
        %v423 = vadd.f32 %v421, 1e-05
        %v424 = vrsqrt.pop %v422
        %v425 = vrsqrt.pop %v423
        %v426 = vmul.f32 %v410, %v424
        %v427 = vmul.f32 %v411, %v425
        %v428 = vlaneseq
        %v429 = vshrl.u32 %v428, 7
        %v430 = vsub.s32 0, %v429
        %v431 = vrot.slane %v398, %v430
        %v432 = vmul.f32 %v426, %v431
        %v433 = vmul.f32 %v427, %v431
        %v434 = vlaneseq
        %v435 = vshrl.u32 %v434, 7
        %v436 = vsub.s32 1, %v435
        %v437 = vrot.slane %v398, %v436
        %v438 = vadd.f32 %v432, %v437
        %v439 = vadd.f32 %v433, %v437
        %v440 = vpack.c.bf16 %v439, %v438
        %v441 = vld [vmem:[%s367] sm:$0xf]
        %v442 = vld [vmem:[%s367 + $0x4] sm:$0xf]
        %v443 = vld [vmem:[%s367 + $0x8] sm:$0xf]
        %v444 = vld [vmem:[%s367 + $0xc] sm:$0xf]
        %v449 = vunpack.c.l.b16 %v441
        %v450 = vunpack.c.l.b16 %v442
        %v451 = vunpack.c.l.b16 %v443
        %v452 = vunpack.c.l.b16 %v444
        %v453 = vpack.c.b16 %v450, %v449
        %v454 = vpack.c.b16 %v452, %v451
        %v458 = vsel %vm400, %v440, 0
        %460 = vmatprep.subr.bf16.mxu0 0
        %461 = vmatpush1.bf16.msra.mxu0 %v453
        %462 = vmatprep.subr.bf16.mxu0 0
        %463 = vmatpush1.bf16.msra.mxu0 %v454
        %464 = vmatprep.subr.bf16.mxu0 0
        %465 = vmatpush1.bf16.msra.mxu0 0
        %466 = vmatprep.subr.bf16.mxu0 0
        %467 = vmatpush1.bf16.msra.mxu0 0
        %468 = vmatprep.subr.bf16.mxu0 0
        %469 = vmatpush1.bf16.msra.mxu0 0
        %470 = vmatprep.subr.bf16.mxu0 0
        %471 = vmatpush1.bf16.msra.mxu0 0
        %472 = vmatprep.subr.bf16.mxu0 0
        %473 = vmatpush1.bf16.msra.mxu0 0
        %474 = vmatprep.subr.bf16.mxu0 0
        %475 = vmatpush1.bf16.msra.mxu0 0
        %476 = vmatprep.subr.bf16.mxu0 0
        %477 = vmatpush1.bf16.msra.mxu0 0
        %478 = vmatprep.subr.bf16.mxu0 0
        %479 = vmatpush1.bf16.msra.mxu0 0
        %480 = vmatprep.subr.bf16.mxu0 0
        %481 = vmatpush1.bf16.msra.mxu0 0
        %482 = vmatprep.subr.bf16.mxu0 0
        %483 = vmatpush1.bf16.msra.mxu0 0
        %484 = vmatprep.subr.bf16.mxu0 0
        %485 = vmatpush1.bf16.msra.mxu0 0
        %486 = vmatprep.subr.bf16.mxu0 0
        %487 = vmatpush1.bf16.msra.mxu0 0
        %488 = vmatprep.subr.bf16.mxu0 0
        %489 = vmatpush1.bf16.msra.mxu0 0
        %490 = vmatprep.subr.bf16.mxu0 0
        %491 = vmatpush1.bf16.msra.mxu0 0
        %492 = vmatprep.mubr.bf16.mxu0 0
        %493 = vmatmul.mubr.bf16.gmra.mrb[0].mxu0 %v458
        %v494 = vpop.f32.mrb[0].mxu0
        %v495 = vadd.f32 0.0, %v494
        %v496 = vpop.f32.mrb[0].mxu0
        %v497 = vpop.f32.mrb[0].mxu0
        %v498 = vadd.f32 0.0, %v497
        %v499 = vpop.f32.mrb[0].mxu0
        %500 = vdwg.mxu0
        %v501 = vlaneseq
        %v502 = vshrl.u32 %v501, 7
        %v503 = vsub.s32 4, %v502
        %v504 = vrot.slane %v398, %v503
        %v505 = vadd.f32 %v495, %v504
        %v506 = vadd.f32 %v498, %v504
        %v507 = vpack.c.bf16 %v506, %v505
        %v508 = vlaneseq
        %v509 = vshrl.u32 %v508, 7
        %v510 = vsub.s32 5, %v509
        %v511 = vrot.slane %v398, %v510
        %513 = vrot.lane.b32.xlu0 %v511, 32
        %v514 = vpop.permute.xlu0 %513
        %v516 = vadd.f32 %v495, %v514
        %v517 = vadd.f32 %v498, %v514
        %v518 = vpack.c.bf16 %v517, %v516
        %v519 = vlaneseq
        %v520 = vshrl.u32 %v519, 7
        %v521 = vsub.s32 6, %v520
        %v522 = vrot.slane %v398, %v521
        %524 = vrot.lane.b32.xlu0 %v522, 64
        %v525 = vpop.permute.xlu0 %524
        %v527 = vadd.f32 %v495, %v525
        %v528 = vadd.f32 %v498, %v525
        %v529 = vpack.c.bf16 %v528, %v527
        %531 = vrot.lane.b32.xlu0 %v507, 120
        %v532 = vpop.permute.xlu0 %531
        %533 = vrot.lane.b32.xlu0 %v507, 112
        %v534 = vpop.permute.xlu0 %533
        %535 = vrot.lane.b32.xlu0 %v507, 104
        %v536 = vpop.permute.xlu0 %535
        %538 = vrot.lane.b32.xlu0 %v518, 120
        %v539 = vpop.permute.xlu0 %538
        %540 = vrot.lane.b32.xlu0 %v518, 112
        %v541 = vpop.permute.xlu0 %540
        %542 = vrot.lane.b32.xlu0 %v518, 104
        %v543 = vpop.permute.xlu0 %542
        %545 = vrot.lane.b32.xlu0 %v529, 120
        %v546 = vpop.permute.xlu0 %545
        %547 = vrot.lane.b32.xlu0 %v529, 112
        %v548 = vpop.permute.xlu0 %547
        %549 = vrot.lane.b32.xlu0 %v529, 104
        %v550 = vpop.permute.xlu0 %549
        %v551 = vld [vmem:[%s1] sm:$0xff]
        %v552 = vld [vmem:[%s1 + $0x8] sm:$0xff]
        %553 = vrot.lane.b32.xlu0 %v518, 96
        %v554 = vpop.permute.xlu0 %553
        %vm555 = vcmask 64512
        %v557 = vsel %vm555, %v507, 0
        %v560 = vsel %vm555, %v554, 0
        %562 = vmatprep.subr.bf16.mxu0 0
        %563 = vmatpush1.bf16.xpose.msra.mxu0 %v560
        %564 = vmatprep.subr.bf16.mxu0 0
        %565 = vmatpush1.bf16.xpose.msra.mxu0 0
        %566 = vmatprep.subr.bf16.mxu0 0
        %567 = vmatpush1.bf16.xpose.msra.mxu0 0
        %568 = vmatprep.subr.bf16.mxu0 0
        %569 = vmatpush1.bf16.xpose.msra.mxu0 0
        %570 = vmatprep.subr.bf16.mxu0 0
        %571 = vmatpush1.bf16.xpose.msra.mxu0 0
        %572 = vmatprep.subr.bf16.mxu0 0
        %573 = vmatpush1.bf16.xpose.msra.mxu0 0
        %574 = vmatprep.subr.bf16.mxu0 0
        %575 = vmatpush1.bf16.xpose.msra.mxu0 0
        %576 = vmatprep.subr.bf16.mxu0 0
        %577 = vmatpush1.bf16.xpose.msra.mxu0 0
        %578 = vmatprep.subr.bf16.mxu0 0
        %579 = vmatpush1.bf16.xpose.msra.mxu0 0
        %580 = vmatprep.subr.bf16.mxu0 0
        %581 = vmatpush1.bf16.xpose.msra.mxu0 0
        %582 = vmatprep.subr.bf16.mxu0 0
        %583 = vmatpush1.bf16.xpose.msra.mxu0 0
        %584 = vmatprep.subr.bf16.mxu0 0
        %585 = vmatpush1.bf16.xpose.msra.mxu0 0
        %586 = vmatprep.subr.bf16.mxu0 0
        %587 = vmatpush1.bf16.xpose.msra.mxu0 0
        %588 = vmatprep.subr.bf16.mxu0 0
        %589 = vmatpush1.bf16.xpose.msra.mxu0 0
        %590 = vmatprep.subr.bf16.mxu0 0
        %591 = vmatpush1.bf16.xpose.msra.mxu0 0
        %592 = vmatprep.subr.bf16.mxu0 0
        %593 = vmatpush1.bf16.xpose.msra.mxu0 0
        %594 = vmatprep.mubr.bf16.mxu0 0
        %595 = vmatmul.mubr.bf16.gmra.mrb[0].mxu0 %v557
        %v596 = vpop.f32.mrb[0].mxu0
        %v597 = vadd.f32 %v551, %v596
        %v598 = vpop.f32.mrb[0].mxu0
        %v599 = vpop.f32.mrb[0].mxu0
        %v600 = vadd.f32 %v552, %v599
        %v601 = vpop.f32.mrb[0].mxu0
        %602 = vdwg.mxu0
        %603 = vrot.lane.b32.xlu0 %v539, 96
        %v604 = vpop.permute.xlu0 %603
        %v606 = vsel %vm555, %v532, 0
        %v609 = vsel %vm555, %v604, 0
        %611 = vmatprep.subr.bf16.mxu0 0
        %612 = vmatpush1.bf16.xpose.msra.mxu0 %v609
        %613 = vmatprep.subr.bf16.mxu0 0
        %614 = vmatpush1.bf16.xpose.msra.mxu0 0
        %615 = vmatprep.subr.bf16.mxu0 0
        %616 = vmatpush1.bf16.xpose.msra.mxu0 0
        %617 = vmatprep.subr.bf16.mxu0 0
        %618 = vmatpush1.bf16.xpose.msra.mxu0 0
        %619 = vmatprep.subr.bf16.mxu0 0
        %620 = vmatpush1.bf16.xpose.msra.mxu0 0
        %621 = vmatprep.subr.bf16.mxu0 0
        %622 = vmatpush1.bf16.xpose.msra.mxu0 0
        %623 = vmatprep.subr.bf16.mxu0 0
        %624 = vmatpush1.bf16.xpose.msra.mxu0 0
        %625 = vmatprep.subr.bf16.mxu0 0
        %626 = vmatpush1.bf16.xpose.msra.mxu0 0
        %627 = vmatprep.subr.bf16.mxu0 0
        %628 = vmatpush1.bf16.xpose.msra.mxu0 0
        %629 = vmatprep.subr.bf16.mxu0 0
        %630 = vmatpush1.bf16.xpose.msra.mxu0 0
        %631 = vmatprep.subr.bf16.mxu0 0
        %632 = vmatpush1.bf16.xpose.msra.mxu0 0
        %633 = vmatprep.subr.bf16.mxu0 0
        %634 = vmatpush1.bf16.xpose.msra.mxu0 0
        %635 = vmatprep.subr.bf16.mxu0 0
        %636 = vmatpush1.bf16.xpose.msra.mxu0 0
        %637 = vmatprep.subr.bf16.mxu0 0
        %638 = vmatpush1.bf16.xpose.msra.mxu0 0
        %639 = vmatprep.subr.bf16.mxu0 0
        %640 = vmatpush1.bf16.xpose.msra.mxu0 0
        %641 = vmatprep.subr.bf16.mxu0 0
        %642 = vmatpush1.bf16.xpose.msra.mxu0 0
        %643 = vmatprep.mubr.bf16.mxu0 0
        %644 = vmatmul.mubr.bf16.gmra.mrb[0].mxu0 %v606
        %v645 = vpop.f32.mrb[0].mxu0
        %v646 = vadd.f32 %v551, %v645
        %v647 = vpop.f32.mrb[0].mxu0
        %v648 = vpop.f32.mrb[0].mxu0
        %v649 = vadd.f32 %v552, %v648
        %v650 = vpop.f32.mrb[0].mxu0
        %651 = vdwg.mxu0
        %652 = vrot.lane.b32.xlu0 %v541, 96
        %v653 = vpop.permute.xlu0 %652
        %v655 = vsel %vm555, %v534, 0
        %v658 = vsel %vm555, %v653, 0
        %660 = vmatprep.subr.bf16.mxu0 0
        %661 = vmatpush1.bf16.xpose.msra.mxu0 %v658
        %662 = vmatprep.subr.bf16.mxu0 0
        %663 = vmatpush1.bf16.xpose.msra.mxu0 0
        %664 = vmatprep.subr.bf16.mxu0 0
        %665 = vmatpush1.bf16.xpose.msra.mxu0 0
        %666 = vmatprep.subr.bf16.mxu0 0
        %667 = vmatpush1.bf16.xpose.msra.mxu0 0
        %668 = vmatprep.subr.bf16.mxu0 0
        %669 = vmatpush1.bf16.xpose.msra.mxu0 0
        %670 = vmatprep.subr.bf16.mxu0 0
        %671 = vmatpush1.bf16.xpose.msra.mxu0 0
        %672 = vmatprep.subr.bf16.mxu0 0
        %673 = vmatpush1.bf16.xpose.msra.mxu0 0
        %674 = vmatprep.subr.bf16.mxu0 0
        %675 = vmatpush1.bf16.xpose.msra.mxu0 0
        %676 = vmatprep.subr.bf16.mxu0 0
        %677 = vmatpush1.bf16.xpose.msra.mxu0 0
        %678 = vmatprep.subr.bf16.mxu0 0
        %679 = vmatpush1.bf16.xpose.msra.mxu0 0
        %680 = vmatprep.subr.bf16.mxu0 0
        %681 = vmatpush1.bf16.xpose.msra.mxu0 0
        %682 = vmatprep.subr.bf16.mxu0 0
        %683 = vmatpush1.bf16.xpose.msra.mxu0 0
        %684 = vmatprep.subr.bf16.mxu0 0
        %685 = vmatpush1.bf16.xpose.msra.mxu0 0
        %686 = vmatprep.subr.bf16.mxu0 0
        %687 = vmatpush1.bf16.xpose.msra.mxu0 0
        %688 = vmatprep.subr.bf16.mxu0 0
        %689 = vmatpush1.bf16.xpose.msra.mxu0 0
        %690 = vmatprep.subr.bf16.mxu0 0
        %691 = vmatpush1.bf16.xpose.msra.mxu0 0
        %692 = vmatprep.mubr.bf16.mxu0 0
        %693 = vmatmul.mubr.bf16.gmra.mrb[0].mxu0 %v655
        %v694 = vpop.f32.mrb[0].mxu0
        %v695 = vadd.f32 %v551, %v694
        %v696 = vpop.f32.mrb[0].mxu0
        %v697 = vpop.f32.mrb[0].mxu0
        %v698 = vadd.f32 %v552, %v697
        %v699 = vpop.f32.mrb[0].mxu0
        %700 = vdwg.mxu0
        %701 = vrot.lane.b32.xlu0 %v543, 96
        %v702 = vpop.permute.xlu0 %701
        %v704 = vsel %vm555, %v536, 0
        %v707 = vsel %vm555, %v702, 0
        %709 = vmatprep.subr.bf16.mxu0 0
        %710 = vmatpush1.bf16.xpose.msra.mxu0 %v707
        %711 = vmatprep.subr.bf16.mxu0 0
        %712 = vmatpush1.bf16.xpose.msra.mxu0 0
        %713 = vmatprep.subr.bf16.mxu0 0
        %714 = vmatpush1.bf16.xpose.msra.mxu0 0
        %715 = vmatprep.subr.bf16.mxu0 0
        %716 = vmatpush1.bf16.xpose.msra.mxu0 0
        %717 = vmatprep.subr.bf16.mxu0 0
        %718 = vmatpush1.bf16.xpose.msra.mxu0 0
        %719 = vmatprep.subr.bf16.mxu0 0
        %720 = vmatpush1.bf16.xpose.msra.mxu0 0
        %721 = vmatprep.subr.bf16.mxu0 0
        %722 = vmatpush1.bf16.xpose.msra.mxu0 0
        %723 = vmatprep.subr.bf16.mxu0 0
        %724 = vmatpush1.bf16.xpose.msra.mxu0 0
        %725 = vmatprep.subr.bf16.mxu0 0
        %726 = vmatpush1.bf16.xpose.msra.mxu0 0
        %727 = vmatprep.subr.bf16.mxu0 0
        %728 = vmatpush1.bf16.xpose.msra.mxu0 0
        %729 = vmatprep.subr.bf16.mxu0 0
        %730 = vmatpush1.bf16.xpose.msra.mxu0 0
        %731 = vmatprep.subr.bf16.mxu0 0
        %732 = vmatpush1.bf16.xpose.msra.mxu0 0
        %733 = vmatprep.subr.bf16.mxu0 0
        %734 = vmatpush1.bf16.xpose.msra.mxu0 0
        %735 = vmatprep.subr.bf16.mxu0 0
        %736 = vmatpush1.bf16.xpose.msra.mxu0 0
        %737 = vmatprep.subr.bf16.mxu0 0
        %738 = vmatpush1.bf16.xpose.msra.mxu0 0
        %739 = vmatprep.subr.bf16.mxu0 0
        %740 = vmatpush1.bf16.xpose.msra.mxu0 0
        %741 = vmatprep.mubr.bf16.mxu0 0
        %742 = vmatmul.mubr.bf16.gmra.mrb[0].mxu0 %v704
        %v743 = vpop.f32.mrb[0].mxu0
        %v744 = vadd.f32 %v551, %v743
        %v745 = vpop.f32.mrb[0].mxu0
        %v746 = vpop.f32.mrb[0].mxu0
        %v747 = vadd.f32 %v552, %v746
        %v748 = vpop.f32.mrb[0].mxu0
        %749 = vdwg.mxu0
        %vm750 = vcmask 130048
        %v751 = vsel %vm750, %v597, -inf
        %752 = vmax.xlane.f32.xlu0 %v751
        %v753 = vpop.xlane.xlu0 %752
        %v754 = vsel %vm750, %v600, -inf
        %755 = vmax.xlane.f32.xlu0 %v754
        %v756 = vpop.xlane.xlu0 %755
        %v757 = vsel %vm750, %v646, -inf
        %758 = vmax.xlane.f32.xlu0 %v757
        %v759 = vpop.xlane.xlu0 %758
        %v760 = vsel %vm750, %v649, -inf
        %761 = vmax.xlane.f32.xlu0 %v760
        %v762 = vpop.xlane.xlu0 %761
        %v763 = vsel %vm750, %v695, -inf
        %764 = vmax.xlane.f32.xlu0 %v763
        %v765 = vpop.xlane.xlu0 %764
        %v766 = vsel %vm750, %v698, -inf
        %767 = vmax.xlane.f32.xlu0 %v766
        %v768 = vpop.xlane.xlu0 %767
        %v769 = vsel %vm750, %v744, -inf
        %770 = vmax.xlane.f32.xlu0 %v769
        %v771 = vpop.xlane.xlu0 %770
        %v772 = vsel %vm750, %v747, -inf
        %773 = vmax.xlane.f32.xlu0 %v772
        %v774 = vpop.xlane.xlu0 %773
        %v775 = vsub.f32 %v597, %v753
        %v776 = vsub.f32 %v600, %v756
        %v777 = vsub.f32 %v646, %v759
        %v778 = vsub.f32 %v649, %v762
        %v779 = vsub.f32 %v695, %v765
        %v780 = vsub.f32 %v698, %v768
        %v781 = vsub.f32 %v744, %v771
        %v782 = vsub.f32 %v747, %v774
        %v783 = vmul.f32 %v775, 1.442695
        %v784 = vpow.pop %v783
        %v785 = vmul.f32 %v776, 1.442695
        %v786 = vpow.pop %v785
        %v787 = vmul.f32 %v777, 1.442695
        %v788 = vpow.pop %v787
        %v789 = vmul.f32 %v778, 1.442695
        %v790 = vpow.pop %v789
        %v791 = vmul.f32 %v779, 1.442695
        %v792 = vpow.pop %v791
        %v793 = vmul.f32 %v780, 1.442695
        %v794 = vpow.pop %v793
        %v795 = vmul.f32 %v781, 1.442695
        %v796 = vpow.pop %v795
        %v797 = vmul.f32 %v782, 1.442695
        %v798 = vpow.pop %v797
        %v799 = vsel %vm750, %v784, 0.0
        %800 = vadd.xlane.f32.xlu0 %v799
        %v801 = vpop.xlane.xlu0 %800
        %v802 = vsel %vm750, %v786, 0.0
        %803 = vadd.xlane.f32.xlu0 %v802
        %v804 = vpop.xlane.xlu0 %803
        %v805 = vsel %vm750, %v788, 0.0
        %806 = vadd.xlane.f32.xlu0 %v805
        %v807 = vpop.xlane.xlu0 %806
        %v808 = vsel %vm750, %v790, 0.0
        %809 = vadd.xlane.f32.xlu0 %v808
        %v810 = vpop.xlane.xlu0 %809
        %v811 = vsel %vm750, %v792, 0.0
        %812 = vadd.xlane.f32.xlu0 %v811
        %v813 = vpop.xlane.xlu0 %812
        %v814 = vsel %vm750, %v794, 0.0
        %815 = vadd.xlane.f32.xlu0 %v814
        %v816 = vpop.xlane.xlu0 %815
        %v817 = vsel %vm750, %v796, 0.0
        %818 = vadd.xlane.f32.xlu0 %v817
        %v819 = vpop.xlane.xlu0 %818
        %v820 = vsel %vm750, %v798, 0.0
        %821 = vadd.xlane.f32.xlu0 %v820
        %v822 = vpop.xlane.xlu0 %821
        %v823 = vrcp.pop %v801
        %v824 = vrcp.pop %v804
        %v825 = vrcp.pop %v807
        %v826 = vrcp.pop %v810
        %v827 = vrcp.pop %v813
        %v828 = vrcp.pop %v816
        %v829 = vrcp.pop %v819
        %v830 = vrcp.pop %v822
        %v831 = vmul.f32 %v784, %v823
        %v832 = vmul.f32 %v786, %v824
        %v833 = vmul.f32 %v788, %v825
        %v834 = vmul.f32 %v790, %v826
        %v835 = vmul.f32 %v792, %v827
        %v836 = vmul.f32 %v794, %v828
        %v837 = vmul.f32 %v796, %v829
        %v838 = vmul.f32 %v798, %v830
        %v839 = vpack.c.bf16 %v832, %v831
        %v840 = vpack.c.bf16 %v834, %v833
        %v841 = vpack.c.bf16 %v836, %v835
        %v842 = vpack.c.bf16 %v838, %v837
        %843 = vrot.lane.b32.xlu0 %v529, 64
        %v844 = vpop.permute.xlu0 %843
        %v847 = vsel %vm750, %v839, 0
        %849 = vmatprep.subr.bf16.mxu0 0
        %850 = vmatpush1.bf16.msra.mxu0 %v844
        %851 = vmatprep.subr.bf16.mxu0 0
        %852 = vmatpush1.bf16.msra.mxu0 0
        %853 = vmatprep.subr.bf16.mxu0 0
        %854 = vmatpush1.bf16.msra.mxu0 0
        %855 = vmatprep.subr.bf16.mxu0 0
        %856 = vmatpush1.bf16.msra.mxu0 0
        %857 = vmatprep.subr.bf16.mxu0 0
        %858 = vmatpush1.bf16.msra.mxu0 0
        %859 = vmatprep.subr.bf16.mxu0 0
        %860 = vmatpush1.bf16.msra.mxu0 0
        %861 = vmatprep.subr.bf16.mxu0 0
        %862 = vmatpush1.bf16.msra.mxu0 0
        %863 = vmatprep.subr.bf16.mxu0 0
        %864 = vmatpush1.bf16.msra.mxu0 0
        %865 = vmatprep.subr.bf16.mxu0 0
        %866 = vmatpush1.bf16.msra.mxu0 0
        %867 = vmatprep.subr.bf16.mxu0 0
        %868 = vmatpush1.bf16.msra.mxu0 0
        %869 = vmatprep.subr.bf16.mxu0 0
        %870 = vmatpush1.bf16.msra.mxu0 0
        %871 = vmatprep.subr.bf16.mxu0 0
        %872 = vmatpush1.bf16.msra.mxu0 0
        %873 = vmatprep.subr.bf16.mxu0 0
        %874 = vmatpush1.bf16.msra.mxu0 0
        %875 = vmatprep.subr.bf16.mxu0 0
        %876 = vmatpush1.bf16.msra.mxu0 0
        %877 = vmatprep.subr.bf16.mxu0 0
        %878 = vmatpush1.bf16.msra.mxu0 0
        %879 = vmatprep.subr.bf16.mxu0 0
        %880 = vmatpush1.bf16.msra.mxu0 0
        %881 = vmatprep.mubr.bf16.mxu0 0
        %882 = vmatmul.mubr.bf16.gmra.mrb[0].mxu0 %v847
        %v883 = vpop.f32.mrb[0].mxu0
        %v884 = vadd.f32 0.0, %v883
        %v885 = vpop.f32.mrb[0].mxu0
        %v886 = vpop.f32.mrb[0].mxu0
        %v887 = vadd.f32 0.0, %v886
        %v888 = vpop.f32.mrb[0].mxu0
        %889 = vdwg.mxu0
        %890 = vrot.lane.b32.xlu0 %v546, 64
        %v891 = vpop.permute.xlu0 %890
        %v894 = vsel %vm750, %v840, 0
        %896 = vmatprep.subr.bf16.mxu0 0
        %897 = vmatpush1.bf16.msra.mxu0 %v891
        %898 = vmatprep.subr.bf16.mxu0 0
        %899 = vmatpush1.bf16.msra.mxu0 0
        %900 = vmatprep.subr.bf16.mxu0 0
        %901 = vmatpush1.bf16.msra.mxu0 0
        %902 = vmatprep.subr.bf16.mxu0 0
        %903 = vmatpush1.bf16.msra.mxu0 0
        %904 = vmatprep.subr.bf16.mxu0 0
        %905 = vmatpush1.bf16.msra.mxu0 0
        %906 = vmatprep.subr.bf16.mxu0 0
        %907 = vmatpush1.bf16.msra.mxu0 0
        %908 = vmatprep.subr.bf16.mxu0 0
        %909 = vmatpush1.bf16.msra.mxu0 0
        %910 = vmatprep.subr.bf16.mxu0 0
        %911 = vmatpush1.bf16.msra.mxu0 0
        %912 = vmatprep.subr.bf16.mxu0 0
        %913 = vmatpush1.bf16.msra.mxu0 0
        %914 = vmatprep.subr.bf16.mxu0 0
        %915 = vmatpush1.bf16.msra.mxu0 0
        %916 = vmatprep.subr.bf16.mxu0 0
        %917 = vmatpush1.bf16.msra.mxu0 0
        %918 = vmatprep.subr.bf16.mxu0 0
        %919 = vmatpush1.bf16.msra.mxu0 0
        %920 = vmatprep.subr.bf16.mxu0 0
        %921 = vmatpush1.bf16.msra.mxu0 0
        %922 = vmatprep.subr.bf16.mxu0 0
        %923 = vmatpush1.bf16.msra.mxu0 0
        %924 = vmatprep.subr.bf16.mxu0 0
        %925 = vmatpush1.bf16.msra.mxu0 0
        %926 = vmatprep.subr.bf16.mxu0 0
        %927 = vmatpush1.bf16.msra.mxu0 0
        %928 = vmatprep.mubr.bf16.mxu0 0
        %929 = vmatmul.mubr.bf16.gmra.mrb[0].mxu0 %v894
        %v930 = vpop.f32.mrb[0].mxu0
        %v931 = vadd.f32 0.0, %v930
        %v932 = vpop.f32.mrb[0].mxu0
        %v933 = vpop.f32.mrb[0].mxu0
        %v934 = vadd.f32 0.0, %v933
        %v935 = vpop.f32.mrb[0].mxu0
        %936 = vdwg.mxu0
        %937 = vrot.lane.b32.xlu0 %v548, 64
        %v938 = vpop.permute.xlu0 %937
        %v941 = vsel %vm750, %v841, 0
        %943 = vmatprep.subr.bf16.mxu0 0
        %944 = vmatpush1.bf16.msra.mxu0 %v938
        %945 = vmatprep.subr.bf16.mxu0 0
        %946 = vmatpush1.bf16.msra.mxu0 0
        %947 = vmatprep.subr.bf16.mxu0 0
        %948 = vmatpush1.bf16.msra.mxu0 0
        %949 = vmatprep.subr.bf16.mxu0 0
        %950 = vmatpush1.bf16.msra.mxu0 0
        %951 = vmatprep.subr.bf16.mxu0 0
        %952 = vmatpush1.bf16.msra.mxu0 0
        %953 = vmatprep.subr.bf16.mxu0 0
        %954 = vmatpush1.bf16.msra.mxu0 0
        %955 = vmatprep.subr.bf16.mxu0 0
        %956 = vmatpush1.bf16.msra.mxu0 0
        %957 = vmatprep.subr.bf16.mxu0 0
        %958 = vmatpush1.bf16.msra.mxu0 0
        %959 = vmatprep.subr.bf16.mxu0 0
        %960 = vmatpush1.bf16.msra.mxu0 0
        %961 = vmatprep.subr.bf16.mxu0 0
        %962 = vmatpush1.bf16.msra.mxu0 0
        %963 = vmatprep.subr.bf16.mxu0 0
        %964 = vmatpush1.bf16.msra.mxu0 0
        %965 = vmatprep.subr.bf16.mxu0 0
        %966 = vmatpush1.bf16.msra.mxu0 0
        %967 = vmatprep.subr.bf16.mxu0 0
        %968 = vmatpush1.bf16.msra.mxu0 0
        %969 = vmatprep.subr.bf16.mxu0 0
        %970 = vmatpush1.bf16.msra.mxu0 0
        %971 = vmatprep.subr.bf16.mxu0 0
        %972 = vmatpush1.bf16.msra.mxu0 0
        %973 = vmatprep.subr.bf16.mxu0 0
        %974 = vmatpush1.bf16.msra.mxu0 0
        %975 = vmatprep.mubr.bf16.mxu0 0
        %976 = vmatmul.mubr.bf16.gmra.mrb[0].mxu0 %v941
        %v977 = vpop.f32.mrb[0].mxu0
        %v978 = vadd.f32 0.0, %v977
        %v979 = vpop.f32.mrb[0].mxu0
        %v980 = vpop.f32.mrb[0].mxu0
        %v981 = vadd.f32 0.0, %v980
        %v982 = vpop.f32.mrb[0].mxu0
        %983 = vdwg.mxu0
        %984 = vrot.lane.b32.xlu0 %v550, 64
        %v985 = vpop.permute.xlu0 %984
        %v988 = vsel %vm750, %v842, 0
        %990 = vmatprep.subr.bf16.mxu0 0
        %991 = vmatpush1.bf16.msra.mxu0 %v985
        %992 = vmatprep.subr.bf16.mxu0 0
        %993 = vmatpush1.bf16.msra.mxu0 0
        %994 = vmatprep.subr.bf16.mxu0 0
        %995 = vmatpush1.bf16.msra.mxu0 0
        %996 = vmatprep.subr.bf16.mxu0 0
        %997 = vmatpush1.bf16.msra.mxu0 0
        %998 = vmatprep.subr.bf16.mxu0 0
        %999 = vmatpush1.bf16.msra.mxu0 0
        %1000 = vmatprep.subr.bf16.mxu0 0
        %1001 = vmatpush1.bf16.msra.mxu0 0
        %1002 = vmatprep.subr.bf16.mxu0 0
        %1003 = vmatpush1.bf16.msra.mxu0 0
        %1004 = vmatprep.subr.bf16.mxu0 0
        %1005 = vmatpush1.bf16.msra.mxu0 0
        %1006 = vmatprep.subr.bf16.mxu0 0
        %1007 = vmatpush1.bf16.msra.mxu0 0
        %1008 = vmatprep.subr.bf16.mxu0 0
        %1009 = vmatpush1.bf16.msra.mxu0 0
        %1010 = vmatprep.subr.bf16.mxu0 0
        %1011 = vmatpush1.bf16.msra.mxu0 0
        %1012 = vmatprep.subr.bf16.mxu0 0
        %1013 = vmatpush1.bf16.msra.mxu0 0
        %1014 = vmatprep.subr.bf16.mxu0 0
        %1015 = vmatpush1.bf16.msra.mxu0 0
        %1016 = vmatprep.subr.bf16.mxu0 0
        %1017 = vmatpush1.bf16.msra.mxu0 0
        %1018 = vmatprep.subr.bf16.mxu0 0
        %1019 = vmatpush1.bf16.msra.mxu0 0
        %1020 = vmatprep.subr.bf16.mxu0 0
        %1021 = vmatpush1.bf16.msra.mxu0 0
        %1022 = vmatprep.mubr.bf16.mxu0 0
        %1023 = vmatmul.mubr.bf16.gmra.mrb[0].mxu0 %v988
        %v1024 = vpop.f32.mrb[0].mxu0
        %v1025 = vadd.f32 0.0, %v1024
        %v1026 = vpop.f32.mrb[0].mxu0
        %v1027 = vpop.f32.mrb[0].mxu0
        %v1028 = vadd.f32 0.0, %v1027
        %v1029 = vpop.f32.mrb[0].mxu0
        %1030 = vdwg.mxu0
        %v1031 = vpack.c.bf16 %v887, %v884
        %1032 = vst.msk [vmem:[#allocation3] sm:$0xff] %vm555, %v1031
        %v1033 = vpack.c.bf16 %v934, %v931
        %1035 = vrot.lane.b32.xlu0 %v1033, 8
        %v1036 = vpop.permute.xlu0 %1035
        %vm1038 = vcmask 130112
        %1039 = vst.msk [vmem:[#allocation3] sm:$0xff] %vm1038, %v1036
        %v1040 = vpack.c.bf16 %v981, %v978
        %1042 = vrot.lane.b32.xlu0 %v1040, 16
        %v1043 = vpop.permute.xlu0 %1042
        %vm1045 = vcmask 195712
        %1046 = vst.msk [vmem:[#allocation3] sm:$0xff] %vm1045, %v1043
        %v1047 = vpack.c.bf16 %v1028, %v1025
        %1049 = vrot.lane.b32.xlu0 %v1047, 24
        %v1050 = vpop.permute.xlu0 %1049
        %vm1052 = vcmask 261312
        %1053 = vst.msk [vmem:[#allocation3] sm:$0xff] %vm1052, %v1050
        %v1054 = vld [vmem:[#allocation3] sm:$0xff]
        %v1055 = vld [vmem:[%s372] sm:$0xf]
        %v1056 = vld [vmem:[%s372 + $0x4] sm:$0xf]
        %v1057 = vld [vmem:[%s372 + $0x8] sm:$0xf]
        %v1058 = vld [vmem:[%s372 + $0xc] sm:$0xf]
        %v1059 = vlaneseq
        %v1060 = vshrl.u32 %v1059, 7
        %v1061 = vsub.s32 7, %v1060
        %v1062 = vrot.slane %v398, %v1061
        %v1067 = vunpack.c.l.b16 %v1055
        %v1068 = vunpack.c.l.b16 %v1056
        %v1069 = vunpack.c.l.b16 %v1057
        %v1070 = vunpack.c.l.b16 %v1058
        %v1071 = vpack.c.b16 %v1068, %v1067
        %v1072 = vpack.c.b16 %v1070, %v1069
        %v1076 = vsel %vm400, %v1054, 0
        %1078 = vmatprep.subr.bf16.mxu0 0
        %1079 = vmatpush1.bf16.msra.mxu0 %v1071
        %1080 = vmatprep.subr.bf16.mxu0 0
        %1081 = vmatpush1.bf16.msra.mxu0 %v1072
        %1082 = vmatprep.subr.bf16.mxu0 0
        %1083 = vmatpush1.bf16.msra.mxu0 0
        %1084 = vmatprep.subr.bf16.mxu0 0
        %1085 = vmatpush1.bf16.msra.mxu0 0
        %1086 = vmatprep.subr.bf16.mxu0 0
        %1087 = vmatpush1.bf16.msra.mxu0 0
        %1088 = vmatprep.subr.bf16.mxu0 0
        %1089 = vmatpush1.bf16.msra.mxu0 0
        %1090 = vmatprep.subr.bf16.mxu0 0
        %1091 = vmatpush1.bf16.msra.mxu0 0
        %1092 = vmatprep.subr.bf16.mxu0 0
        %1093 = vmatpush1.bf16.msra.mxu0 0
        %1094 = vmatprep.subr.bf16.mxu0 0
        %1095 = vmatpush1.bf16.msra.mxu0 0
        %1096 = vmatprep.subr.bf16.mxu0 0
        %1097 = vmatpush1.bf16.msra.mxu0 0
        %1098 = vmatprep.subr.bf16.mxu0 0
        %1099 = vmatpush1.bf16.msra.mxu0 0
        %1100 = vmatprep.subr.bf16.mxu0 0
        %1101 = vmatpush1.bf16.msra.mxu0 0
        %1102 = vmatprep.subr.bf16.mxu0 0
        %1103 = vmatpush1.bf16.msra.mxu0 0
        %1104 = vmatprep.subr.bf16.mxu0 0
        %1105 = vmatpush1.bf16.msra.mxu0 0
        %1106 = vmatprep.subr.bf16.mxu0 0
        %1107 = vmatpush1.bf16.msra.mxu0 0
        %1108 = vmatprep.subr.bf16.mxu0 0
        %1109 = vmatpush1.bf16.msra.mxu0 0
        %1110 = vmatprep.mubr.bf16.mxu0 0
        %1111 = vmatmul.mubr.bf16.gmra.mrb[0].mxu0 %v1076
        %v1112 = vpop.f32.mrb[0].mxu0
        %v1113 = vadd.f32 %v1062, %v1112
        %v1114 = vpop.f32.mrb[0].mxu0
        %v1115 = vpop.f32.mrb[0].mxu0
        %v1116 = vadd.f32 %v1062, %v1115
        %v1117 = vpop.f32.mrb[0].mxu0
        %1118 = vdwg.mxu0
        %v1119 = vadd.f32 %v396, %v1113
        %v1120 = vadd.f32 %v397, %v1116
        %v1121 = vsel %vm400, %v1119, 0.0
        %1122 = vadd.xlane.f32.xlu0 %v1121
        %v1123 = vpop.xlane.xlu0 %1122
        %v1124 = vsel %vm400, %v1120, 0.0
        %1125 = vadd.xlane.f32.xlu0 %v1124
        %v1126 = vpop.xlane.xlu0 %1125
        %v1127 = vmul.f32 %v1123, %v407
        %v1128 = vmul.f32 %v1126, %v407
        %v1129 = vsub.f32 %v1119, %v1127
        %v1130 = vsub.f32 %v1120, %v1128
        %v1131 = vmul.f32 %v1129, %v1129
        %v1132 = vmul.f32 %v1130, %v1130
        %v1133 = vsel %vm400, %v1131, 0.0
        %1134 = vadd.xlane.f32.xlu0 %v1133
        %v1135 = vpop.xlane.xlu0 %1134
        %v1136 = vsel %vm400, %v1132, 0.0
        %1137 = vadd.xlane.f32.xlu0 %v1136
        %v1138 = vpop.xlane.xlu0 %1137
        %v1139 = vmul.f32 %v1135, %v407
        %v1140 = vmul.f32 %v1138, %v407
        %v1141 = vadd.f32 %v1139, 1e-05
        %v1142 = vadd.f32 %v1140, 1e-05
        %v1143 = vrsqrt.pop %v1141
        %v1144 = vrsqrt.pop %v1142
        %v1145 = vmul.f32 %v1129, %v1143
        %v1146 = vmul.f32 %v1130, %v1144
        %v1147 = vlaneseq
        %v1148 = vshrl.u32 %v1147, 7
        %v1149 = vsub.s32 2, %v1148
        %v1150 = vrot.slane %v398, %v1149
        %v1151 = vmul.f32 %v1145, %v1150
        %v1152 = vmul.f32 %v1146, %v1150
        %v1153 = vlaneseq
        %v1154 = vshrl.u32 %v1153, 7
        %v1155 = vsub.s32 3, %v1154
        %v1156 = vrot.slane %v398, %v1155
        %v1157 = vadd.f32 %v1151, %v1156
        %v1158 = vadd.f32 %v1152, %v1156
        %v1159 = vpack.c.bf16 %v1158, %v1157
        %v1160 = vld [vmem:[%s377] sm:$0xf]
        %v1161 = vld [vmem:[%s377 + $0x4] sm:$0xf]
        %v1162 = vld [vmem:[%s377 + $0x8] sm:$0xf]
        %v1163 = vld [vmem:[%s377 + $0xc] sm:$0xf]
        %v1164 = vld [vmem:[%s380] sm:$0x1]
        %v1166 = vlaneseq
        %v1167 = vshrl.u32 %v1166, 7
        %v1168 = vsub.s32 0, %v1167
        %v1169 = vrot.slane %v1164, %v1168
        %v1175 = vunpack.c.l.b16 %v1160
        %v1176 = vunpack.c.l.b16 %v1161
        %v1177 = vunpack.c.l.b16 %v1162
        %v1178 = vunpack.c.l.b16 %v1163
        %v1179 = vpack.c.b16 %v1176, %v1175
        %v1180 = vpack.c.b16 %v1178, %v1177
        %v1184 = vsel %vm400, %v1159, 0
        %1186 = vmatprep.subr.bf16.mxu0 0
        %1187 = vmatpush1.bf16.msra.mxu0 %v1179
        %1188 = vmatprep.subr.bf16.mxu0 0
        %1189 = vmatpush1.bf16.msra.mxu0 %v1180
        %1190 = vmatprep.subr.bf16.mxu0 0
        %1191 = vmatpush1.bf16.msra.mxu0 0
        %1192 = vmatprep.subr.bf16.mxu0 0
        %1193 = vmatpush1.bf16.msra.mxu0 0
        %1194 = vmatprep.subr.bf16.mxu0 0
        %1195 = vmatpush1.bf16.msra.mxu0 0
        %1196 = vmatprep.subr.bf16.mxu0 0
        %1197 = vmatpush1.bf16.msra.mxu0 0
        %1198 = vmatprep.subr.bf16.mxu0 0
        %1199 = vmatpush1.bf16.msra.mxu0 0
        %1200 = vmatprep.subr.bf16.mxu0 0
        %1201 = vmatpush1.bf16.msra.mxu0 0
        %1202 = vmatprep.subr.bf16.mxu0 0
        %1203 = vmatpush1.bf16.msra.mxu0 0
        %1204 = vmatprep.subr.bf16.mxu0 0
        %1205 = vmatpush1.bf16.msra.mxu0 0
        %1206 = vmatprep.subr.bf16.mxu0 0
        %1207 = vmatpush1.bf16.msra.mxu0 0
        %1208 = vmatprep.subr.bf16.mxu0 0
        %1209 = vmatpush1.bf16.msra.mxu0 0
        %1210 = vmatprep.subr.bf16.mxu0 0
        %1211 = vmatpush1.bf16.msra.mxu0 0
        %1212 = vmatprep.subr.bf16.mxu0 0
        %1213 = vmatpush1.bf16.msra.mxu0 0
        %1214 = vmatprep.subr.bf16.mxu0 0
        %1215 = vmatpush1.bf16.msra.mxu0 0
        %1216 = vmatprep.subr.bf16.mxu0 0
        %1217 = vmatpush1.bf16.msra.mxu0 0
        %1218 = vmatprep.mubr.bf16.mxu0 0
        %1219 = vmatmul.mubr.bf16.gmra.mrb[0].mxu0 %v1184
        %v1220 = vpop.f32.mrb[0].mxu0
        %v1221 = vadd.f32 %v1169, %v1220
        %v1222 = vpop.f32.mrb[0].mxu0
        %v1223 = vpop.f32.mrb[0].mxu0
        %v1224 = vadd.f32 %v1169, %v1223
        %v1225 = vpop.f32.mrb[0].mxu0
        %1226 = vdwg.mxu0
        %v1227 = vmul.f32 %v1221, 1.702
        %v1228 = vmul.f32 %v1224, 1.702
        %v1229 = vxor.u32 %v1227, 2147483648
        %v1230 = vxor.u32 %v1228, 2147483648
        %v1231 = vmul.f32 %v1229, 1.442695
        %v1232 = vpow.pop %v1231
        %v1233 = vmul.f32 %v1230, 1.442695
        %v1234 = vpow.pop %v1233
        %v1235 = vadd.f32 %v1232, 1.0
        %v1236 = vadd.f32 %v1234, 1.0
        %v1237 = vrcp.pop %v1235
        %v1238 = vmul.f32 1.0, %v1237
        %v1239 = vrcp.pop %v1236
        %v1240 = vmul.f32 1.0, %v1239
        %v1241 = vmul.f32 %v1221, %v1238
        %v1242 = vmul.f32 %v1224, %v1240
        %v1243 = vpack.c.bf16 %v1242, %v1241
        %v1244 = vld [vmem:[%s385] sm:$0xf]
        %v1245 = vld [vmem:[%s385 + $0x4] sm:$0xf]
        %v1246 = vld [vmem:[%s385 + $0x8] sm:$0xf]
        %v1247 = vld [vmem:[%s385 + $0xc] sm:$0xf]
        %v1248 = vld [vmem:[%s385 + $0x10] sm:$0xf]
        %v1249 = vld [vmem:[%s385 + $0x14] sm:$0xf]
        %v1250 = vld [vmem:[%s385 + $0x18] sm:$0xf]
        %v1251 = vld [vmem:[%s385 + $0x1c] sm:$0xf]
        %v1252 = vld [vmem:[%s385 + $0x20] sm:$0xf]
        %v1253 = vld [vmem:[%s385 + $0x24] sm:$0xf]
        %v1254 = vld [vmem:[%s385 + $0x28] sm:$0xf]
        %v1255 = vld [vmem:[%s385 + $0x2c] sm:$0xf]
        %v1256 = vld [vmem:[%s385 + $0x30] sm:$0xf]
        %v1257 = vld [vmem:[%s385 + $0x34] sm:$0xf]
        %v1258 = vld [vmem:[%s385 + $0x38] sm:$0xf]
        %v1259 = vld [vmem:[%s385 + $0x3c] sm:$0xf]
        %v1260 = vlaneseq
        %v1261 = vshrl.u32 %v1260, 7
        %v1262 = vsub.s32 0, %v1261
        %v1263 = vrot.slane %v399, %v1262
        %v1280 = vunpack.c.l.b16 %v1244
        %v1281 = vunpack.c.l.b16 %v1245
        %v1282 = vunpack.c.l.b16 %v1246
        %v1283 = vunpack.c.l.b16 %v1247
        %v1284 = vunpack.c.l.b16 %v1248
        %v1285 = vunpack.c.l.b16 %v1249
        %v1286 = vunpack.c.l.b16 %v1250
        %v1287 = vunpack.c.l.b16 %v1251
        %v1288 = vunpack.c.l.b16 %v1252
        %v1289 = vunpack.c.l.b16 %v1253
        %v1290 = vunpack.c.l.b16 %v1254
        %v1291 = vunpack.c.l.b16 %v1255
        %v1292 = vunpack.c.l.b16 %v1256
        %v1293 = vunpack.c.l.b16 %v1257
        %v1294 = vunpack.c.l.b16 %v1258
        %v1295 = vunpack.c.l.b16 %v1259
        %v1296 = vpack.c.b16 %v1281, %v1280
        %v1297 = vpack.c.b16 %v1283, %v1282
        %v1298 = vpack.c.b16 %v1285, %v1284
        %v1299 = vpack.c.b16 %v1287, %v1286
        %v1300 = vpack.c.b16 %v1289, %v1288
        %v1301 = vpack.c.b16 %v1291, %v1290
        %v1302 = vpack.c.b16 %v1293, %v1292
        %v1303 = vpack.c.b16 %v1295, %v1294
        %1312 = vmatprep.subr.bf16.mxu0 0
        %1313 = vmatpush1.bf16.msra.mxu0 %v1296
        %1314 = vmatprep.subr.bf16.mxu0 0
        %1315 = vmatpush1.bf16.msra.mxu0 %v1297
        %1316 = vmatprep.subr.bf16.mxu0 0
        %1317 = vmatpush1.bf16.msra.mxu0 %v1298
        %1318 = vmatprep.subr.bf16.mxu0 0
        %1319 = vmatpush1.bf16.msra.mxu0 %v1299
        %1320 = vmatprep.subr.bf16.mxu0 0
        %1321 = vmatpush1.bf16.msra.mxu0 %v1300
        %1322 = vmatprep.subr.bf16.mxu0 0
        %1323 = vmatpush1.bf16.msra.mxu0 %v1301
        %1324 = vmatprep.subr.bf16.mxu0 0
        %1325 = vmatpush1.bf16.msra.mxu0 %v1302
        %1326 = vmatprep.subr.bf16.mxu0 0
        %1327 = vmatpush1.bf16.msra.mxu0 %v1303
        %1328 = vmatprep.subr.bf16.mxu0 0
        %1329 = vmatpush1.bf16.msra.mxu0 0
        %1330 = vmatprep.subr.bf16.mxu0 0
        %1331 = vmatpush1.bf16.msra.mxu0 0
        %1332 = vmatprep.subr.bf16.mxu0 0
        %1333 = vmatpush1.bf16.msra.mxu0 0
        %1334 = vmatprep.subr.bf16.mxu0 0
        %1335 = vmatpush1.bf16.msra.mxu0 0
        %1336 = vmatprep.subr.bf16.mxu0 0
        %1337 = vmatpush1.bf16.msra.mxu0 0
        %1338 = vmatprep.subr.bf16.mxu0 0
        %1339 = vmatpush1.bf16.msra.mxu0 0
        %1340 = vmatprep.subr.bf16.mxu0 0
        %1341 = vmatpush1.bf16.msra.mxu0 0
        %1342 = vmatprep.subr.bf16.mxu0 0
        %1343 = vmatpush1.bf16.msra.mxu0 0
        %1344 = vmatprep.mubr.bf16.mxu0 0
        %1345 = vmatmul.mubr.bf16.gmra.mrb[0].mxu0 %v1243
        %v1346 = vpop.f32.mrb[0].mxu0
        %v1347 = vadd.f32 %v1263, %v1346
        %v1348 = vpop.f32.mrb[0].mxu0
        %v1349 = vpop.f32.mrb[0].mxu0
        %v1350 = vadd.f32 %v1263, %v1349
        %v1351 = vpop.f32.mrb[0].mxu0
        %1352 = vdwg.mxu0
        %v1353 = vadd.f32 %v1119, %v1347
        %v1354 = vadd.f32 %v1120, %v1350
        %1355 = vst.msk [vmem:[#allocation2] sm:$0xff] %vm400, %v1353
        %1356 = vst.msk [vmem:[#allocation2 + $0x8] sm:$0xff] %vm400, %v1354
        %p1357 = scmp.eq.s32.totalorder %s20, 1
        // Predicated region
        $region57: #{tpu_custom_call.1} parent=51 // pred_check
          %p1358 = pneg %p1357
        $region58: #{tpu_custom_call.1} parent=51 // pred_check_branch
          %1360 = sbr.rel (%p1358) target = $region60
        $region59: #{tpu_custom_call.1} parent=51 // pred_region
          %v1361 = vsel %vm400, %v1353, 0.0
          %1362 = vadd.xlane.f32.xlu0 %v1361
          %v1363 = vpop.xlane.xlu0 %1362
          %v1364 = vsel %vm400, %v1354, 0.0
          %1365 = vadd.xlane.f32.xlu0 %v1364
          %v1366 = vpop.xlane.xlu0 %1365
          %v1367 = vmul.f32 %v1363, %v407
          %v1368 = vmul.f32 %v1366, %v407
          %v1369 = vsub.f32 %v1353, %v1367
          %v1370 = vsub.f32 %v1354, %v1368
          %v1371 = vmul.f32 %v1369, %v1369
          %v1372 = vmul.f32 %v1370, %v1370
          %v1373 = vsel %vm400, %v1371, 0.0
          %1374 = vadd.xlane.f32.xlu0 %v1373
          %v1375 = vpop.xlane.xlu0 %1374
          %v1376 = vsel %vm400, %v1372, 0.0
          %1377 = vadd.xlane.f32.xlu0 %v1376
          %v1378 = vpop.xlane.xlu0 %1377
          %v1379 = vmul.f32 %v1375, %v407
          %v1380 = vmul.f32 %v1378, %v407
          %v1381 = vadd.f32 %v1379, 1e-05
          %v1382 = vadd.f32 %v1380, 1e-05
          %v1383 = vrsqrt.pop %v1381
          %v1384 = vrsqrt.pop %v1382
          %v1385 = vmul.f32 %v1369, %v1383
          %v1386 = vmul.f32 %v1370, %v1384
          %v1387 = vlaneseq
          %v1388 = vshrl.u32 %v1387, 7
          %v1389 = vsub.s32 1, %v1388
          %v1390 = vrot.slane %v399, %v1389
          %v1391 = vmul.f32 %v1385, %v1390
          %v1392 = vmul.f32 %v1386, %v1390
          %v1393 = vlaneseq
          %v1394 = vshrl.u32 %v1393, 7
          %v1395 = vsub.s32 2, %v1394
          %v1396 = vrot.slane %v399, %v1395
          %v1397 = vadd.f32 %v1391, %v1396
          %v1398 = vadd.f32 %v1392, %v1396
          %1399 = vst.msk [vmem:[#allocation4] sm:$0xff] %vm400, %v1397
          %1400 = vst.msk [vmem:[#allocation4 + $0x8] sm:$0xff] %vm400, %v1398
        $region60: #{tpu_custom_call.1} parent=51 // pred_fallthru
          _
        // Predicated region
        $region61: #{tpu_custom_call.1} parent=51 // pred_check
          %p1401 = pneg %p231
        $region62: #{tpu_custom_call.1} parent=51 // pred_check_branch
          %1403 = sbr.rel (%p1401) target = $region64
        $region63: #{tpu_custom_call.1} parent=51 // pred_region
          %s1405 = ssub.s32 256, 256
          %1406 = vsyncadd [#allocation5], %s1405
          %s1407 = sshll.u32 [#allocation4], 4
          %s1408 = int_to_ptr.vmem [resolvable:$true] %s1407
          %1413 = dma.vmem_to_hbm [thread:$0]  %s1408, 256, %s8, [#allocation5], 128, 128, 8
        $region64: #{tpu_custom_call.1} parent=51 // pred_fallthru
          _
        // Predicated region
        $region65: #{tpu_custom_call.1} parent=51 // pred_check
          %p1414 = pneg %p231
        $region66: #{tpu_custom_call.1} parent=51 // pred_check_branch
          %1416 = sbr.rel (%p1414) target = $region68
        $region67: #{tpu_custom_call.1} parent=51 // pred_region
          %1417 = dma.done [#allocation5], 256
        $region68: #{tpu_custom_call.1} parent=51 // pred_fallthru
          _
      $region52: #{tpu_custom_call.1} parent=5 // pred_fallthru
        _
      %p1418 = scmp.le.s32.totalorder 2, %s15
      // Predicated region
      $region69: #{tpu_custom_call.1} parent=5 // pred_check
        %p1419 = pneg %p1418
      $region70: #{tpu_custom_call.1} parent=5 // pred_check_branch
        %1421 = sbr.rel (%p1419) target = $region72
      $region71: #{tpu_custom_call.1} parent=5 // pred_region
        %s1422 = ssub.s32 %s15, 2
      $region72: #{tpu_custom_call.1} parent=5 // pred_fallthru
        _
    $region6: #{tpu_custom_call.1} parent=1 // loop_footer
      %s19 = sadd.s32 1, %s15
    $region7: #{tpu_custom_call.1} parent=1 // loop_footer_branch
      %14 = sbr.rel target = $region3
    $region8: #{tpu_custom_call.1} parent=1 // loop_exit
      _
    %1423 = vsyncpa [#allocation5], 1
    %s1424 = scalar_lea.sflag [#allocation5], 1
    %1425 = vsyncpa %s1424, 1

</llo_original>
